<compile_context>
chip_gen: v7x
topology: tpu7x:2x2x1
jax: 0.10.0
libtpu: 0.0.40
codegen_flags: <defaults>
</compile_context>

<pallas_src>
import functools
import math

import jax
import jax.numpy as jnp
from jax.experimental import pallas as pl
from jax.experimental.pallas import tpu as pltpu

BN_EPS = 1e-5


def _round_up(x, m):
    return (x + m - 1) // m * m


def _vmem_limit_bytes():
    """Per-generation scoped-VMEM budget with headroom for double-buffers / Mosaic scratch."""
    cap = None
    try:
        cap = getattr(pltpu.get_tpu_info(), "vmem_capacity_bytes", None)
    except Exception:
        cap = None
    if not cap or cap <= 0:
        # Safe everywhere: below v7x's 64 MiB/TC physical, above the 16/32 MiB scoped defaults.
        return 48 * 1024 * 1024
    return max(32 * 1024 * 1024, min(int(0.85 * cap), 112 * 1024 * 1024))


def _fcnn_kernel(num_layers, *refs):
    """Fused folded-BN FCNN forward for one batch tile.

    refs layout:
      refs[0]                         x tile       (TB, C_in)      f32 (cast to bf16 in-kernel)
      refs[1 + 2*l], refs[2 + 2*l]    W_l (C_l, Hp) bf16, b_l (1, Hp) f32   (BN folded, lane-padded)
      refs[-3]                        w_out row    (1, Hp)         f32  (VMEM)
      refs[-2]                        b_out        (1, 1)          f32  (SMEM scalar)
      refs[-1]                        out tile     (1, TB)         f32  (lane-dense)
    """
    x_ref = refs[0]
    w_out_ref = refs[-3]
    b_out_ref = refs[-2]
    out_ref = refs[-1]

    h = x_ref[...].astype(jnp.bfloat16)                      # (TB, C_in) bf16
    for l in range(num_layers):
        w_ref = refs[1 + 2 * l]
        b_ref = refs[2 + 2 * l]
        acc = jnp.dot(h, w_ref[...],                         # MXU, bf16 in / f32 acc
                      preferred_element_type=jnp.float32)
        # Bias + ReLU on the VPU; cast to bf16 immediately so only one copy of h stays live.
        h = jnp.maximum(acc + b_ref[...], 0.0).astype(jnp.bfloat16)
        # Dropout: identity at inference.

    # Final Linear(Hp, 1): VPU multiply + lane reduction, written lane-dense (no (TB,1) matmul,
    # no masked 1/128-lane stores). Zero-padded head columns contribute exactly 0.
    y = jnp.sum(h.astype(jnp.float32) * w_out_ref[...], axis=-1) + b_out_ref[0, 0]   # (TB,)
    out_ref[...] = y[None, :]                                # (1, TB)


def _build_call(num_layers, n_pad, c_in, tb, grid, layer_params, w_out_row,
                vmem_limit, cost, single_buffer_weights):
    def const_spec(shape):
        # Grid-invariant block: single-buffer it to halve resident VMEM.
        if single_buffer_weights and hasattr(pl, "Buffered"):
            return pl.BlockSpec(shape, lambda i: (0, 0), pipeline_mode=pl.Buffered(1))
        return pl.BlockSpec(shape, lambda i: (0, 0))

    in_specs = [pl.BlockSpec((tb, c_in), lambda i: (i, 0))]   # pipelined activation tiles
    for p in layer_params:                                    # weights/biases stay resident
        in_specs.append(const_spec(p.shape))
    in_specs.append(const_spec(w_out_row.shape))
    in_specs.append(pl.BlockSpec(memory_space=pltpu.MemorySpace.SMEM))   # b_out scalar

    return pl.pallas_call(
        functools.partial(_fcnn_kernel, num_layers),
        out_shape=jax.ShapeDtypeStruct((1, n_pad), jnp.float32),
        grid=grid,
        in_specs=in_specs,
        out_specs=pl.BlockSpec((1, tb), lambda i: (0, i)),
        compiler_params=pltpu.CompilerParams(
            dimension_semantics=("parallel",),                # megacore sharding
            vmem_limit_bytes=vmem_limit,
        ),
        cost_estimate=cost,
    )


def fcnn_forward(x, folded_params, num_layers, *, batch_tile=None):
    """x: (N, C_in) f32.  folded_params: output of fold_params().  Returns (N,) f32."""
    n, c_in = x.shape

    layer_params = folded_params[:2 * num_layers]             # (W_0, b_0, ..., W_{L-1}, b_{L-1})
    w_out_row, b_out = folded_params[2 * num_layers:]         # (1, Hp) f32, (1, 1) f32
    h_pad = layer_params[0].shape[1]
    weight_bytes = sum(int(p.size) * p.dtype.itemsize for p in layer_params)

    if batch_tile is None:
        if h_pad >= 2048:
            batch_tile = 256          # keep (TB,Hp) activation temporaries small vs. weights
        elif weight_bytes <= 8 * 1024 * 1024:
            batch_tile = 1024         # tiny resident weights: amortize per-grid-step overhead
        else:
            batch_tile = 512

    # Pad the batch only to the 128-lane quantum (not a whole tile); the last grid tile may
    # overhang and is masked by Pallas. Padded rows are sliced away after the call.
    n_pad = _round_up(max(n, 1), 128)
    tb = min(_round_up(batch_tile, 128), n_pad)
    grid = (pl.cdiv(n_pad, tb),)

    x_pad = x if n_pad == n else jnp.pad(x, ((0, n_pad - n), (0, 0)))

    flops = 2 * n_pad * (c_in * h_pad + max(num_layers - 1, 0) * h_pad * h_pad + h_pad)
    bytes_accessed = (int(x_pad.size) * x_pad.dtype.itemsize
                      + weight_bytes
                      + int(w_out_row.size) * 4 + 4
                      + n_pad * 4)
    cost = pl.CostEstimate(flops=flops, bytes_accessed=bytes_accessed, transcendentals=0)
    vmem_limit = _vmem_limit_bytes()

    args = (x_pad, *layer_params, w_out_row, b_out)
    try:
        out = _build_call(num_layers, n_pad, c_in, tb, grid, layer_params, w_out_row,
                          vmem_limit, cost, single_buffer_weights=True)(*args)
    except Exception:
        # Fallback for JAX versions without BlockSpec(pipeline_mode=...) support.
        out = _build_call(num_layers, n_pad, c_in, tb, grid, layer_params, w_out_row,
                          vmem_limit, cost, single_buffer_weights=False)(*args)

    return out[0, :n]                                          # matches torch .squeeze(-1)


def init_torch_params(key, in_channels, hidden_channels, num_layers):
    """Deterministic synthetic parameters with PyTorch shapes (Linear W is (out, in))."""
    layers = []
    c_in = in_channels
    for _ in range(num_layers):
        key, kg, kb, km, kv, kw, kbi = jax.random.split(key, 7)
        layers.append(dict(
            gamma=1.0 + 0.1 * jax.random.normal(kg, (c_in,), jnp.float32),
            beta=0.1 * jax.random.normal(kb, (c_in,), jnp.float32),
            mean=0.1 * jax.random.normal(km, (c_in,), jnp.float32),
            var=jnp.abs(1.0 + 0.1 * jax.random.normal(kv, (c_in,), jnp.float32)),
            w=jax.random.normal(kw, (hidden_channels, c_in), jnp.float32) / math.sqrt(c_in),
            b=0.1 * jax.random.normal(kbi, (hidden_channels,), jnp.float32),
        ))
        c_in = hidden_channels
    key, kw, kb = jax.random.split(key, 3)
    head = dict(
        w=jax.random.normal(kw, (1, hidden_channels), jnp.float32) / math.sqrt(hidden_channels),
        b=0.1 * jax.random.normal(kb, (1,), jnp.float32),
    )
    return layers, head


def fold_params(layers, head, lane_align=128):
    """Fold eval-mode BatchNorm into the following Linear; zero-pad hidden dim to `lane_align`.

    Zero padding is exact: padded bias lanes are 0 -> ReLU gives 0 -> padded K-rows of the next
    weight are 0 -> no contribution; padded head columns are 0.
    """
    hidden = head["w"].shape[1]
    h_pad = _round_up(hidden, lane_align)
    packed = []
    for li, p in enumerate(layers):
        scale = p["gamma"] * jax.lax.rsqrt(p["var"] + BN_EPS)          # (C,)
        shift = p["beta"] - p["mean"] * scale                          # (C,)
        w_t = p["w"].T                                                 # (C, H)  [in, out]
        w_folded = scale[:, None] * w_t                                # (C, H)  f32
        b_folded = shift @ w_t + p["b"]                                # (H,)    f32
        c, h = w_folded.shape
        c_pad = c if li == 0 else h_pad                                # layer 0 keeps raw C_in
        w_folded = jnp.pad(w_folded, ((0, c_pad - c), (0, h_pad - h)))
        b_folded = jnp.pad(b_folded, ((0, h_pad - h),))
        packed += [w_folded.astype(jnp.bfloat16),                      # (C_pad, Hp) bf16
                   b_folded.reshape(1, -1).astype(jnp.float32)]        # (1, Hp)     f32
    w_out = jnp.pad(head["w"].astype(jnp.float32), ((0, 0), (0, h_pad - hidden)))   # (1, Hp)
    packed.append(w_out)
    packed.append(head["b"].reshape(1, 1).astype(jnp.float32))         # (1, 1) f32
    return tuple(packed)


def fcnn_reference(x, layers, head):
    """Pure-JAX f32 reference matching the PyTorch module in eval mode."""
    h = x.astype(jnp.float32)
    for p in layers:
        h = (h - p["mean"]) / jnp.sqrt(p["var"] + BN_EPS) * p["gamma"] + p["beta"]
        h = jnp.maximum(h @ p["w"].T + p["b"], 0.0)
    return (h @ head["w"].T + head["b"]).squeeze(-1)


def fcnn_reference_folded(x, folded_params, num_layers):
    """Reference with the same bf16-matmul / f32-accumulate numerics as the kernel."""
    h = x.astype(jnp.bfloat16)
    for l in range(num_layers):
        w = folded_params[2 * l]
        b = folded_params[2 * l + 1]
        h = jnp.maximum(jnp.dot(h, w, preferred_element_type=jnp.float32) + b,
                        0.0).astype(jnp.bfloat16)
    w_out, b_out = folded_params[2 * num_layers:]
    return jnp.sum(h.astype(jnp.float32) * w_out, axis=-1) + b_out[0, 0]


if __name__ == "__main__":
    # Small shapes consistent with the module: x is (batch, in_channels)
    batch = 8
    in_channels = 16
    hidden_channels = 32
    num_layers = 3
    dropout = 0.1  # inference: Dropout is identity  # noqa: F841

    key = jax.random.PRNGKey(0)
    k_x, k_p = jax.random.split(key)
    x = jax.random.normal(k_x, (batch, in_channels), jnp.float32)

    layers, head = init_torch_params(k_p, in_channels, hidden_channels, num_layers)
    folded = fold_params(layers, head)

    out = fcnn_forward(x, folded, num_layers)
    out = jax.block_until_ready(out)
    assert out.shape == (batch,), out.shape

    # Tight check against a reference with identical bf16-matmul numerics.
    ref_bf16 = fcnn_reference_folded(x, folded, num_layers)
    assert jnp.allclose(out, ref_bf16, atol=1e-3, rtol=1e-3), (out, ref_bf16)

    # Sanity check against the full-f32 PyTorch-eval reference (looser: bf16 matmul inputs).
    ref_f32 = fcnn_reference(x, layers, head)
    assert jnp.allclose(out, ref_f32, atol=3e-2, rtol=3e-2), (out, ref_f32)

    print("KERNEL_OK")
</pallas_src>

<mosaic_0001>
module attributes {stable_mosaic.version = 11 : i64} {
  func.func @_fcnn_kernel(%arg0: i32, %arg1: memref<128x16xf32, #tpu.memory_space<vmem>>, %arg2: memref<16x128xbf16, #tpu.memory_space<vmem>>, %arg3: memref<1x128xf32, #tpu.memory_space<vmem>>, %arg4: memref<128x128xbf16, #tpu.memory_space<vmem>>, %arg5: memref<1x128xf32, #tpu.memory_space<vmem>>, %arg6: memref<128x128xbf16, #tpu.memory_space<vmem>>, %arg7: memref<1x128xf32, #tpu.memory_space<vmem>>, %arg8: memref<1x128xf32, #tpu.memory_space<vmem>>, %arg9: memref<1x1xf32, #tpu.memory_space<smem>>, %arg10: memref<1x128xf32, #tpu.memory_space<vmem>>) attributes {dimension_semantics = [#tpu.dimension_semantics<parallel>], iteration_bounds = array<i64: 1>, scalar_prefetch = 0 : i64, scratch_operands = 0 : i64, tpu.core_type = #tpu.core_type<tc>, window_params = [{transform_indices = @transform_0, window_bounds = array<i64: 128, 16>}, {pipeline_mode = #tpu.pipeline_mode<synchronous>, transform_indices = @transform_1, window_bounds = array<i64: 16, 128>}, {pipeline_mode = #tpu.pipeline_mode<synchronous>, transform_indices = @transform_2, window_bounds = array<i64: 1, 128>}, {pipeline_mode = #tpu.pipeline_mode<synchronous>, transform_indices = @transform_3, window_bounds = array<i64: 128, 128>}, {pipeline_mode = #tpu.pipeline_mode<synchronous>, transform_indices = @transform_4, window_bounds = array<i64: 1, 128>}, {pipeline_mode = #tpu.pipeline_mode<synchronous>, transform_indices = @transform_5, window_bounds = array<i64: 128, 128>}, {pipeline_mode = #tpu.pipeline_mode<synchronous>, transform_indices = @transform_6, window_bounds = array<i64: 1, 128>}, {pipeline_mode = #tpu.pipeline_mode<synchronous>, transform_indices = @transform_7, window_bounds = array<i64: 1, 128>}, {transform_indices = @transform_8, window_bounds = array<i64: 1, 1>}, {transform_indices = @transform_9, window_bounds = array<i64: 1, 128>}]} {
    %c0 = arith.constant 0 : index
    %c0_0 = arith.constant 0 : index
    %0 = vector.load %arg1[%c0, %c0_0] : memref<128x16xf32, #tpu.memory_space<vmem>>, vector<128x16xf32>
    %1 = arith.truncf %0 : vector<128x16xf32> to vector<128x16xbf16>
    %c0_1 = arith.constant 0 : index
    %c0_2 = arith.constant 0 : index
    %2 = vector.load %arg2[%c0_1, %c0_2] : memref<16x128xbf16, #tpu.memory_space<vmem>>, vector<16x128xbf16>
    %cst = arith.constant dense<0.000000e+00> : vector<128x128xf32>
    %3 = tpu.matmul %1, %2, %cst {dimension_numbers = #tpu.dot_dimension_numbers<[1], [0], [0], [1], [0, 0, 1, 1], [], []>} : vector<128x16xbf16>, vector<16x128xbf16>, vector<128x128xf32> -> vector<128x128xf32>
    %c0_3 = arith.constant 0 : index
    %c0_4 = arith.constant 0 : index
    %4 = vector.load %arg3[%c0_3, %c0_4] : memref<1x128xf32, #tpu.memory_space<vmem>>, vector<1x128xf32>
    %5 = vector.broadcast %4 : vector<1x128xf32> to vector<128x128xf32>
    %6 = arith.addf %3, %5 : vector<128x128xf32>
    %cst_5 = arith.constant 0.000000e+00 : f32
    %7 = vector.broadcast %cst_5 : f32 to vector<128x128xf32>
    %8 = arith.maximumf %6, %7 : vector<128x128xf32>
    %9 = arith.truncf %8 : vector<128x128xf32> to vector<128x128xbf16>
    %c0_6 = arith.constant 0 : index
    %c0_7 = arith.constant 0 : index
    %10 = vector.load %arg4[%c0_6, %c0_7] : memref<128x128xbf16, #tpu.memory_space<vmem>>, vector<128x128xbf16>
    %cst_8 = arith.constant dense<0.000000e+00> : vector<128x128xf32>
    %11 = tpu.matmul %9, %10, %cst_8 {dimension_numbers = #tpu.dot_dimension_numbers<[1], [0], [0], [1], [0, 0, 1, 1], [], []>} : vector<128x128xbf16>, vector<128x128xbf16>, vector<128x128xf32> -> vector<128x128xf32>
    %c0_9 = arith.constant 0 : index
    %c0_10 = arith.constant 0 : index
    %12 = vector.load %arg5[%c0_9, %c0_10] : memref<1x128xf32, #tpu.memory_space<vmem>>, vector<1x128xf32>
    %13 = vector.broadcast %12 : vector<1x128xf32> to vector<128x128xf32>
    %14 = arith.addf %11, %13 : vector<128x128xf32>
    %cst_11 = arith.constant 0.000000e+00 : f32
    %15 = vector.broadcast %cst_11 : f32 to vector<128x128xf32>
    %16 = arith.maximumf %14, %15 : vector<128x128xf32>
    %17 = arith.truncf %16 : vector<128x128xf32> to vector<128x128xbf16>
    %c0_12 = arith.constant 0 : index
    %c0_13 = arith.constant 0 : index
    %18 = vector.load %arg6[%c0_12, %c0_13] : memref<128x128xbf16, #tpu.memory_space<vmem>>, vector<128x128xbf16>
    %cst_14 = arith.constant dense<0.000000e+00> : vector<128x128xf32>
    %19 = tpu.matmul %17, %18, %cst_14 {dimension_numbers = #tpu.dot_dimension_numbers<[1], [0], [0], [1], [0, 0, 1, 1], [], []>} : vector<128x128xbf16>, vector<128x128xbf16>, vector<128x128xf32> -> vector<128x128xf32>
    %c0_15 = arith.constant 0 : index
    %c0_16 = arith.constant 0 : index
    %20 = vector.load %arg7[%c0_15, %c0_16] : memref<1x128xf32, #tpu.memory_space<vmem>>, vector<1x128xf32>
    %21 = vector.broadcast %20 : vector<1x128xf32> to vector<128x128xf32>
    %22 = arith.addf %19, %21 : vector<128x128xf32>
    %cst_17 = arith.constant 0.000000e+00 : f32
    %23 = vector.broadcast %cst_17 : f32 to vector<128x128xf32>
    %24 = arith.maximumf %22, %23 : vector<128x128xf32>
    %25 = arith.truncf %24 : vector<128x128xf32> to vector<128x128xbf16>
    %26 = arith.extf %25 : vector<128x128xbf16> to vector<128x128xf32>
    %c0_18 = arith.constant 0 : index
    %c0_19 = arith.constant 0 : index
    %27 = vector.load %arg8[%c0_18, %c0_19] : memref<1x128xf32, #tpu.memory_space<vmem>>, vector<1x128xf32>
    %28 = vector.broadcast %27 : vector<1x128xf32> to vector<128x128xf32>
    %29 = arith.mulf %26, %28 : vector<128x128xf32>
    %cst_20 = arith.constant dense<0.000000e+00> : vector<128xf32>
    %30 = vector.multi_reduction <add>, %29, %cst_20 [1] : vector<128x128xf32> to vector<128xf32>
    %c0_21 = arith.constant 0 : index
    %c0_22 = arith.constant 0 : index
    %31 = memref.load %arg9[%c0_21, %c0_22] : memref<1x1xf32, #tpu.memory_space<smem>>
    %32 = vector.broadcast %31 : f32 to vector<128xf32>
    %33 = arith.addf %30, %32 : vector<128xf32>
    %34 = vector.shape_cast %33 : vector<128xf32> to vector<1x128xf32>
    %c0_23 = arith.constant 0 : index
    %c0_24 = arith.constant 0 : index
    %35 = vector.load %arg10[%c0_23, %c0_24] : memref<1x128xf32, #tpu.memory_space<vmem>>, vector<1x128xf32>
    tpu.vector_store %arg10[%c0_23, %c0_24], %34 {strides = array<i32>} : memref<1x128xf32, #tpu.memory_space<vmem>>, vector<1x128xf32>,
    return
  }
  func.func @transform_0(%arg0: i32) -> (i32, i32) {
    %c0_i32 = arith.constant 0 : i32
    %c0_i32_0 = arith.constant 0 : i32
    return %arg0, %c0_i32 : i32, i32
  }
  func.func @transform_1(%arg0: i32) -> (i32, i32) {
    %c0_i32 = arith.constant 0 : i32
    %c0_i32_0 = arith.constant 0 : i32
    %c0_i32_1 = arith.constant 0 : i32
    return %c0_i32, %c0_i32_0 : i32, i32
  }
  func.func @transform_2(%arg0: i32) -> (i32, i32) {
    %c0_i32 = arith.constant 0 : i32
    %c0_i32_0 = arith.constant 0 : i32
    %c0_i32_1 = arith.constant 0 : i32
    return %c0_i32, %c0_i32_0 : i32, i32
  }
  func.func @transform_3(%arg0: i32) -> (i32, i32) {
    %c0_i32 = arith.constant 0 : i32
    %c0_i32_0 = arith.constant 0 : i32
    %c0_i32_1 = arith.constant 0 : i32
    return %c0_i32, %c0_i32_0 : i32, i32
  }
  func.func @transform_4(%arg0: i32) -> (i32, i32) {
    %c0_i32 = arith.constant 0 : i32
    %c0_i32_0 = arith.constant 0 : i32
    %c0_i32_1 = arith.constant 0 : i32
    return %c0_i32, %c0_i32_0 : i32, i32
  }
  func.func @transform_5(%arg0: i32) -> (i32, i32) {
    %c0_i32 = arith.constant 0 : i32
    %c0_i32_0 = arith.constant 0 : i32
    %c0_i32_1 = arith.constant 0 : i32
    return %c0_i32, %c0_i32_0 : i32, i32
  }
  func.func @transform_6(%arg0: i32) -> (i32, i32) {
    %c0_i32 = arith.constant 0 : i32
    %c0_i32_0 = arith.constant 0 : i32
    %c0_i32_1 = arith.constant 0 : i32
    return %c0_i32, %c0_i32_0 : i32, i32
  }
  func.func @transform_7(%arg0: i32) -> (i32, i32) {
    %c0_i32 = arith.constant 0 : i32
    %c0_i32_0 = arith.constant 0 : i32
    %c0_i32_1 = arith.constant 0 : i32
    return %c0_i32, %c0_i32_0 : i32, i32
  }
  func.func @transform_8(%arg0: i32) -> (i32, i32) {
    %c0_i32 = arith.constant 0 : i32
    %c0_i32_0 = arith.constant 0 : i32
    %c0_i32_1 = arith.constant 0 : i32
    return %c0_i32, %c0_i32_0 : i32, i32
  }
  func.func @transform_9(%arg0: i32) -> (i32, i32) {
    %c0_i32 = arith.constant 0 : i32
    %c0_i32_0 = arith.constant 0 : i32
    return %c0_i32, %arg0 : i32, i32
  }
}

module attributes {stable_mosaic.version = 11 : i64} {
  func.func @_fcnn_kernel(%arg0: i32, %arg1: memref<128x16xf32, #tpu.memory_space<vmem>>, %arg2: memref<16x128xbf16, #tpu.memory_space<vmem>>, %arg3: memref<1x128xf32, #tpu.memory_space<vmem>>, %arg4: memref<128x128xbf16, #tpu.memory_space<vmem>>, %arg5: memref<1x128xf32, #tpu.memory_space<vmem>>, %arg6: memref<128x128xbf16, #tpu.memory_space<vmem>>, %arg7: memref<1x128xf32, #tpu.memory_space<vmem>>, %arg8: memref<1x128xf32, #tpu.memory_space<vmem>>, %arg9: memref<1x1xf32, #tpu.memory_space<smem>>, %arg10: memref<1x128xf32, #tpu.memory_space<vmem>>) attributes {dimension_semantics = [#tpu.dimension_semantics<parallel>], iteration_bounds = array<i64: 1>, scalar_prefetch = 0 : i64, scratch_operands = 0 : i64, tpu.core_type = #tpu.core_type<tc>, window_params = [{transform_indices = @transform_0, window_bounds = array<i64: 128, 16>}, {pipeline_mode = #tpu.pipeline_mode<synchronous>, transform_indices = @transform_1, window_bounds = array<i64: 16, 128>}, {pipeline_mode = #tpu.pipeline_mode<synchronous>, transform_indices = @transform_2, window_bounds = array<i64: 1, 128>}, {pipeline_mode = #tpu.pipeline_mode<synchronous>, transform_indices = @transform_3, window_bounds = array<i64: 128, 128>}, {pipeline_mode = #tpu.pipeline_mode<synchronous>, transform_indices = @transform_4, window_bounds = array<i64: 1, 128>}, {pipeline_mode = #tpu.pipeline_mode<synchronous>, transform_indices = @transform_5, window_bounds = array<i64: 128, 128>}, {pipeline_mode = #tpu.pipeline_mode<synchronous>, transform_indices = @transform_6, window_bounds = array<i64: 1, 128>}, {pipeline_mode = #tpu.pipeline_mode<synchronous>, transform_indices = @transform_7, window_bounds = array<i64: 1, 128>}, {transform_indices = @transform_8, window_bounds = array<i64: 1, 1>}, {transform_indices = @transform_9, window_bounds = array<i64: 1, 128>}]} {
    %c0 = arith.constant 0 : index
    %c0_0 = arith.constant 0 : index
    %0 = vector.load %arg1[%c0, %c0_0] : memref<128x16xf32, #tpu.memory_space<vmem>>, vector<128x16xf32>
    %1 = arith.truncf %0 : vector<128x16xf32> to vector<128x16xbf16>
    %c0_1 = arith.constant 0 : index
    %c0_2 = arith.constant 0 : index
    %2 = vector.load %arg2[%c0_1, %c0_2] : memref<16x128xbf16, #tpu.memory_space<vmem>>, vector<16x128xbf16>
    %cst = arith.constant dense<0.000000e+00> : vector<128x128xf32>
    %3 = tpu.matmul %1, %2, %cst {dimension_numbers = #tpu.dot_dimension_numbers<[1], [0], [0], [1], [0, 0, 1, 1], [], []>} : vector<128x16xbf16>, vector<16x128xbf16>, vector<128x128xf32> -> vector<128x128xf32>
    %c0_3 = arith.constant 0 : index
    %c0_4 = arith.constant 0 : index
    %4 = vector.load %arg3[%c0_3, %c0_4] : memref<1x128xf32, #tpu.memory_space<vmem>>, vector<1x128xf32>
    %5 = vector.broadcast %4 : vector<1x128xf32> to vector<128x128xf32>
    %6 = arith.addf %3, %5 : vector<128x128xf32>
    %cst_5 = arith.constant 0.000000e+00 : f32
    %7 = vector.broadcast %cst_5 : f32 to vector<128x128xf32>
    %8 = arith.maximumf %6, %7 : vector<128x128xf32>
    %9 = arith.truncf %8 : vector<128x128xf32> to vector<128x128xbf16>
    %c0_6 = arith.constant 0 : index
    %c0_7 = arith.constant 0 : index
    %10 = vector.load %arg4[%c0_6, %c0_7] : memref<128x128xbf16, #tpu.memory_space<vmem>>, vector<128x128xbf16>
    %cst_8 = arith.constant dense<0.000000e+00> : vector<128x128xf32>
    %11 = tpu.matmul %9, %10, %cst_8 {dimension_numbers = #tpu.dot_dimension_numbers<[1], [0], [0], [1], [0, 0, 1, 1], [], []>} : vector<128x128xbf16>, vector<128x128xbf16>, vector<128x128xf32> -> vector<128x128xf32>
    %c0_9 = arith.constant 0 : index
    %c0_10 = arith.constant 0 : index
    %12 = vector.load %arg5[%c0_9, %c0_10] : memref<1x128xf32, #tpu.memory_space<vmem>>, vector<1x128xf32>
    %13 = vector.broadcast %12 : vector<1x128xf32> to vector<128x128xf32>
    %14 = arith.addf %11, %13 : vector<128x128xf32>
    %cst_11 = arith.constant 0.000000e+00 : f32
    %15 = vector.broadcast %cst_11 : f32 to vector<128x128xf32>
    %16 = arith.maximumf %14, %15 : vector<128x128xf32>
    %17 = arith.truncf %16 : vector<128x128xf32> to vector<128x128xbf16>
    %c0_12 = arith.constant 0 : index
    %c0_13 = arith.constant 0 : index
    %18 = vector.load %arg6[%c0_12, %c0_13] : memref<128x128xbf16, #tpu.memory_space<vmem>>, vector<128x128xbf16>
    %cst_14 = arith.constant dense<0.000000e+00> : vector<128x128xf32>
    %19 = tpu.matmul %17, %18, %cst_14 {dimension_numbers = #tpu.dot_dimension_numbers<[1], [0], [0], [1], [0, 0, 1, 1], [], []>} : vector<128x128xbf16>, vector<128x128xbf16>, vector<128x128xf32> -> vector<128x128xf32>
    %c0_15 = arith.constant 0 : index
    %c0_16 = arith.constant 0 : index
    %20 = vector.load %arg7[%c0_15, %c0_16] : memref<1x128xf32, #tpu.memory_space<vmem>>, vector<1x128xf32>
    %21 = vector.broadcast %20 : vector<1x128xf32> to vector<128x128xf32>
    %22 = arith.addf %19, %21 : vector<128x128xf32>
    %cst_17 = arith.constant 0.000000e+00 : f32
    %23 = vector.broadcast %cst_17 : f32 to vector<128x128xf32>
    %24 = arith.maximumf %22, %23 : vector<128x128xf32>
    %25 = arith.truncf %24 : vector<128x128xf32> to vector<128x128xbf16>
    %26 = arith.extf %25 : vector<128x128xbf16> to vector<128x128xf32>
    %c0_18 = arith.constant 0 : index
    %c0_19 = arith.constant 0 : index
    %27 = vector.load %arg8[%c0_18, %c0_19] : memref<1x128xf32, #tpu.memory_space<vmem>>, vector<1x128xf32>
    %28 = vector.broadcast %27 : vector<1x128xf32> to vector<128x128xf32>
    %29 = arith.mulf %26, %28 : vector<128x128xf32>
    %cst_20 = arith.constant dense<0.000000e+00> : vector<128xf32>
    %30 = vector.multi_reduction <add>, %29, %cst_20 [1] : vector<128x128xf32> to vector<128xf32>
    %c0_21 = arith.constant 0 : index
    %c0_22 = arith.constant 0 : index
    %31 = memref.load %arg9[%c0_21, %c0_22] : memref<1x1xf32, #tpu.memory_space<smem>>
    %32 = vector.broadcast %31 : f32 to vector<128xf32>
    %33 = arith.addf %30, %32 : vector<128xf32>
    %34 = vector.shape_cast %33 : vector<128xf32> to vector<1x128xf32>
    %c0_23 = arith.constant 0 : index
    %c0_24 = arith.constant 0 : index
    %35 = vector.load %arg10[%c0_23, %c0_24] : memref<1x128xf32, #tpu.memory_space<vmem>>, vector<1x128xf32>
    tpu.vector_store %arg10[%c0_23, %c0_24], %34 {strides = array<i32>} : memref<1x128xf32, #tpu.memory_space<vmem>>, vector<1x128xf32>,
    return
  }
  func.func @transform_0(%arg0: i32) -> (i32, i32) {
    %c0_i32 = arith.constant 0 : i32
    %c0_i32_0 = arith.constant 0 : i32
    return %arg0, %c0_i32 : i32, i32
  }
  func.func @transform_1(%arg0: i32) -> (i32, i32) {
    %c0_i32 = arith.constant 0 : i32
    %c0_i32_0 = arith.constant 0 : i32
    %c0_i32_1 = arith.constant 0 : i32
    return %c0_i32, %c0_i32_0 : i32, i32
  }
  func.func @transform_2(%arg0: i32) -> (i32, i32) {
    %c0_i32 = arith.constant 0 : i32
    %c0_i32_0 = arith.constant 0 : i32
    %c0_i32_1 = arith.constant 0 : i32
    return %c0_i32, %c0_i32_0 : i32, i32
  }
  func.func @transform_3(%arg0: i32) -> (i32, i32) {
    %c0_i32 = arith.constant 0 : i32
    %c0_i32_0 = arith.constant 0 : i32
    %c0_i32_1 = arith.constant 0 : i32
    return %c0_i32, %c0_i32_0 : i32, i32
  }
  func.func @transform_4(%arg0: i32) -> (i32, i32) {
    %c0_i32 = arith.constant 0 : i32
    %c0_i32_0 = arith.constant 0 : i32
    %c0_i32_1 = arith.constant 0 : i32
    return %c0_i32, %c0_i32_0 : i32, i32
  }
  func.func @transform_5(%arg0: i32) -> (i32, i32) {
    %c0_i32 = arith.constant 0 : i32
    %c0_i32_0 = arith.constant 0 : i32
    %c0_i32_1 = arith.constant 0 : i32
    return %c0_i32, %c0_i32_0 : i32, i32
  }
  func.func @transform_6(%arg0: i32) -> (i32, i32) {
    %c0_i32 = arith.constant 0 : i32
    %c0_i32_0 = arith.constant 0 : i32
    %c0_i32_1 = arith.constant 0 : i32
    return %c0_i32, %c0_i32_0 : i32, i32
  }
  func.func @transform_7(%arg0: i32) -> (i32, i32) {
    %c0_i32 = arith.constant 0 : i32
    %c0_i32_0 = arith.constant 0 : i32
    %c0_i32_1 = arith.constant 0 : i32
    return %c0_i32, %c0_i32_0 : i32, i32
  }
  func.func @transform_8(%arg0: i32) -> (i32, i32) {
    %c0_i32 = arith.constant 0 : i32
    %c0_i32_0 = arith.constant 0 : i32
    %c0_i32_1 = arith.constant 0 : i32
    return %c0_i32, %c0_i32_0 : i32, i32
  }
  func.func @transform_9(%arg0: i32) -> (i32, i32) {
    %c0_i32 = arith.constant 0 : i32
    %c0_i32_0 = arith.constant 0 : i32
    return %c0_i32, %arg0 : i32, i32
  }
}

</mosaic_0001>

<llo_original>
// kernel: tpu_custom_call.1
$region0: #{tpu_custom_call.1}
  #allocation0 [shape = 'u32[]', space=smem, size = 0x4, offset = 0x4, fixed_abs, tag = 'smem constant byte address 0x4 - core index']
  #allocation1 [shape = 'u32[144,128]{1,0:T(1,128)}', space=vmem, size = 0x12000, scoped, tag = 'internal scratch']
  #allocation2 [shape = 'f32[1,1]{1,0:T(1,128)S(6)}', space=smem, size = 0x200, scoped, tag = 'scoped memory for tpu_custom_call.1']
  %s0 = inlined_call_operand.vmem [shape: f32[128,16], index: 0, kind: input, shape index: {}]
  %s1 = inlined_call_operand.vmem [shape: bf16[16,128], index: 1, kind: input, shape index: {}]
  %s2 = inlined_call_operand.vmem [shape: f32[1,128], index: 2, kind: input, shape index: {}]
  %s3 = inlined_call_operand.vmem [shape: bf16[128,128], index: 3, kind: input, shape index: {}]
  %s4 = inlined_call_operand.vmem [shape: f32[1,128], index: 4, kind: input, shape index: {}]
  %s5 = inlined_call_operand.vmem [shape: bf16[128,128], index: 5, kind: input, shape index: {}]
  %s6 = inlined_call_operand.vmem [shape: f32[1,128], index: 6, kind: input, shape index: {}]
  %s7 = inlined_call_operand.vmem [shape: f32[1,128], index: 7, kind: input, shape index: {}]
  %s8 = inlined_call_operand.<no memory space> [shape: f32[1,1], index: 8, kind: input, shape index: {}]
  %s9 = inlined_call_operand.hbm [shape: f32[1,128], index: 9, kind: output, shape index: {}]
  %s10 = sld [smem:[#allocation0]]
  $region46: #{tpu_custom_call.1} parent=0
    _
  %s12 = ssub.s32 1, %s10
  %s13 = scalar_select 0, %s12, %s10
  %14 = sst [smem:[#allocation2]] %s8
  $region1: #{tpu_custom_call.1} parent=0
    #allocation3 [shape = 'u8[512]{0}', space=vmem, size = 0x400, scoped, tag = 'output window, operand 0, single buffered']
    #allocation4 [shape = 's32[1]{0}', space=sflag, size = 0x4, scoped, tag = 'scoped memory for tpu_custom_call.1']
    %15 = vsyncpa [#allocation4], 0
    // Predicated region
    $region2: #{tpu_custom_call.1} parent=1 // pred_check
      _
    $region3: #{tpu_custom_call.1} parent=1 // pred_check_branch
      %17 = sbr.rel (0) target = $region5
    $region4: #{tpu_custom_call.1} parent=1 // pred_region
      _
    $region5: #{tpu_custom_call.1} parent=1 // pred_fallthru
      _
    // Predicated region
    $region6: #{tpu_custom_call.1} parent=1 // pred_check
      _
    $region7: #{tpu_custom_call.1} parent=1 // pred_check_branch
      %19 = sbr.rel (0) target = $region9
    $region8: #{tpu_custom_call.1} parent=1 // pred_region
      _
    $region9: #{tpu_custom_call.1} parent=1 // pred_fallthru
      _
    // Predicated region
    $region10: #{tpu_custom_call.1} parent=1 // pred_check
      _
    $region11: #{tpu_custom_call.1} parent=1 // pred_check_branch
      %21 = sbr.rel (0) target = $region13
    $region12: #{tpu_custom_call.1} parent=1 // pred_region
      _
    $region13: #{tpu_custom_call.1} parent=1 // pred_fallthru
      _
    // Predicated region
    $region14: #{tpu_custom_call.1} parent=1 // pred_check
      _
    $region15: #{tpu_custom_call.1} parent=1 // pred_check_branch
      %23 = sbr.rel (0) target = $region17
    $region16: #{tpu_custom_call.1} parent=1 // pred_region
      _
    $region17: #{tpu_custom_call.1} parent=1 // pred_fallthru
      _
    // Predicated region
    $region18: #{tpu_custom_call.1} parent=1 // pred_check
      _
    $region19: #{tpu_custom_call.1} parent=1 // pred_check_branch
      %25 = sbr.rel (0) target = $region21
    $region20: #{tpu_custom_call.1} parent=1 // pred_region
      _
    $region21: #{tpu_custom_call.1} parent=1 // pred_fallthru
      _
    // Predicated region
    $region22: #{tpu_custom_call.1} parent=1 // pred_check
      _
    $region23: #{tpu_custom_call.1} parent=1 // pred_check_branch
      %27 = sbr.rel (0) target = $region25
    $region24: #{tpu_custom_call.1} parent=1 // pred_region
      _
    $region25: #{tpu_custom_call.1} parent=1 // pred_fallthru
      _
    // Predicated region
    $region26: #{tpu_custom_call.1} parent=1 // pred_check
      _
    $region27: #{tpu_custom_call.1} parent=1 // pred_check_branch
      %29 = sbr.rel (0) target = $region29
    $region28: #{tpu_custom_call.1} parent=1 // pred_region
      _
    $region29: #{tpu_custom_call.1} parent=1 // pred_fallthru
      _
    // Predicated region
    $region30: #{tpu_custom_call.1} parent=1 // pred_check
      _
    $region31: #{tpu_custom_call.1} parent=1 // pred_check_branch
      %31 = sbr.rel (0) target = $region33
    $region32: #{tpu_custom_call.1} parent=1 // pred_region
      _
    $region33: #{tpu_custom_call.1} parent=1 // pred_fallthru
      _
    // Predicated region
    $region34: #{tpu_custom_call.1} parent=1 // pred_check
      _
    $region35: #{tpu_custom_call.1} parent=1 // pred_check_branch
      %33 = sbr.rel (0) target = $region37
    $region36: #{tpu_custom_call.1} parent=1 // pred_region
      _
    $region37: #{tpu_custom_call.1} parent=1 // pred_fallthru
      _
    %v35 = vld [vmem:[%s0] sm:$0xff]
    %v36 = vld [vmem:[%s0 + $0x8] sm:$0xff]
    %v37 = vld [vmem:[%s0 + $0x10] sm:$0xff]
    %v38 = vld [vmem:[%s0 + $0x18] sm:$0xff]
    %v39 = vld [vmem:[%s0 + $0x20] sm:$0xff]
    %v40 = vld [vmem:[%s0 + $0x28] sm:$0xff]
    %v41 = vld [vmem:[%s0 + $0x30] sm:$0xff]
    %v42 = vld [vmem:[%s0 + $0x38] sm:$0xff]
    %v43 = vld [vmem:[%s0 + $0x40] sm:$0xff]
    %v44 = vld [vmem:[%s0 + $0x48] sm:$0xff]
    %v45 = vld [vmem:[%s0 + $0x50] sm:$0xff]
    %v46 = vld [vmem:[%s0 + $0x58] sm:$0xff]
    %v47 = vld [vmem:[%s0 + $0x60] sm:$0xff]
    %v48 = vld [vmem:[%s0 + $0x68] sm:$0xff]
    %v49 = vld [vmem:[%s0 + $0x70] sm:$0xff]
    %v50 = vld [vmem:[%s0 + $0x78] sm:$0xff]
    %v51 = vpack.c.bf16 %v36, %v35
    %v52 = vpack.c.bf16 %v38, %v37
    %v53 = vpack.c.bf16 %v40, %v39
    %v54 = vpack.c.bf16 %v42, %v41
    %v55 = vpack.c.bf16 %v44, %v43
    %v56 = vpack.c.bf16 %v46, %v45
    %v57 = vpack.c.bf16 %v48, %v47
    %v58 = vpack.c.bf16 %v50, %v49
    %v59 = vld [vmem:[%s1] sm:$0xf]
    %v60 = vld [vmem:[%s1 + $0x4] sm:$0xf]
    %v61 = vld [vmem:[%s2] sm:$0x1]
    %v63 = vlaneseq
    %v64 = vshrl.u32 %v63, 7
    %v65 = vsub.s32 0, %v64
    %v66 = vrot.slane %v61, %v65
    %v70 = vunpack.c.l.b16 %v59
    %v71 = vunpack.c.l.b16 %v60
    %v72 = vpack.c.b16 %v71, %v70
    %vm74 = vcmask 130048
    %v76 = vsel %vm74, %v51, 0
    %v79 = vsel %vm74, %v52, 0
    %v82 = vsel %vm74, %v53, 0
    %v85 = vsel %vm74, %v54, 0
    %v88 = vsel %vm74, %v55, 0
    %v91 = vsel %vm74, %v56, 0
    %v94 = vsel %vm74, %v57, 0
    %v97 = vsel %vm74, %v58, 0
    %99 = vmatprep.subr.bf16.mxu0 0
    %100 = vmatpush1.bf16.msra.mxu0 %v72
    %101 = vmatprep.subr.bf16.mxu0 0
    %102 = vmatpush1.bf16.msra.mxu0 0
    %103 = vmatprep.subr.bf16.mxu0 0
    %104 = vmatpush1.bf16.msra.mxu0 0
    %105 = vmatprep.subr.bf16.mxu0 0
    %106 = vmatpush1.bf16.msra.mxu0 0
    %107 = vmatprep.subr.bf16.mxu0 0
    %108 = vmatpush1.bf16.msra.mxu0 0
    %109 = vmatprep.subr.bf16.mxu0 0
    %110 = vmatpush1.bf16.msra.mxu0 0
    %111 = vmatprep.subr.bf16.mxu0 0
    %112 = vmatpush1.bf16.msra.mxu0 0
    %113 = vmatprep.subr.bf16.mxu0 0
    %114 = vmatpush1.bf16.msra.mxu0 0
    %115 = vmatprep.subr.bf16.mxu0 0
    %116 = vmatpush1.bf16.msra.mxu0 0
    %117 = vmatprep.subr.bf16.mxu0 0
    %118 = vmatpush1.bf16.msra.mxu0 0
    %119 = vmatprep.subr.bf16.mxu0 0
    %120 = vmatpush1.bf16.msra.mxu0 0
    %121 = vmatprep.subr.bf16.mxu0 0
    %122 = vmatpush1.bf16.msra.mxu0 0
    %123 = vmatprep.subr.bf16.mxu0 0
    %124 = vmatpush1.bf16.msra.mxu0 0
    %125 = vmatprep.subr.bf16.mxu0 0
    %126 = vmatpush1.bf16.msra.mxu0 0
    %127 = vmatprep.subr.bf16.mxu0 0
    %128 = vmatpush1.bf16.msra.mxu0 0
    %129 = vmatprep.subr.bf16.mxu0 0
    %130 = vmatpush1.bf16.msra.mxu0 0
    %131 = vmatprep.mubr.bf16.mxu0 0
    %132 = vmatmul.mubr.bf16.gmra.mrb[0].mxu0 %v76
    %v133 = vpop.f32.mrb[0].mxu0
    %v134 = vadd.f32 %v66, %v133
    %v135 = vpop.f32.mrb[0].mxu0
    %v136 = vpop.f32.mrb[0].mxu0
    %v137 = vadd.f32 %v66, %v136
    %v138 = vpop.f32.mrb[0].mxu0
    %139 = vmatprep.mubr.bf16.mxu0 0
    %140 = vmatmul.mubr.bf16.gmra.mrb[0].mxu0 %v79
    %v141 = vpop.f32.mrb[0].mxu0
    %v142 = vadd.f32 %v66, %v141
    %v143 = vpop.f32.mrb[0].mxu0
    %v144 = vpop.f32.mrb[0].mxu0
    %v145 = vadd.f32 %v66, %v144
    %v146 = vpop.f32.mrb[0].mxu0
    %147 = vmatprep.mubr.bf16.mxu0 0
    %148 = vmatmul.mubr.bf16.gmra.mrb[0].mxu0 %v82
    %v149 = vpop.f32.mrb[0].mxu0
    %v150 = vadd.f32 %v66, %v149
    %v151 = vpop.f32.mrb[0].mxu0
    %v152 = vpop.f32.mrb[0].mxu0
    %v153 = vadd.f32 %v66, %v152
    %v154 = vpop.f32.mrb[0].mxu0
    %155 = vmatprep.mubr.bf16.mxu0 0
    %156 = vmatmul.mubr.bf16.gmra.mrb[0].mxu0 %v85
    %v157 = vpop.f32.mrb[0].mxu0
    %v158 = vadd.f32 %v66, %v157
    %v159 = vpop.f32.mrb[0].mxu0
    %v160 = vpop.f32.mrb[0].mxu0
    %v161 = vadd.f32 %v66, %v160
    %v162 = vpop.f32.mrb[0].mxu0
    %163 = vmatprep.mubr.bf16.mxu0 0
    %164 = vmatmul.mubr.bf16.gmra.mrb[0].mxu0 %v88
    %v165 = vpop.f32.mrb[0].mxu0
    %v166 = vadd.f32 %v66, %v165
    %v167 = vpop.f32.mrb[0].mxu0
    %v168 = vpop.f32.mrb[0].mxu0
    %v169 = vadd.f32 %v66, %v168
    %v170 = vpop.f32.mrb[0].mxu0
    %171 = vmatprep.mubr.bf16.mxu0 0
    %172 = vmatmul.mubr.bf16.gmra.mrb[0].mxu0 %v91
    %v173 = vpop.f32.mrb[0].mxu0
    %v174 = vadd.f32 %v66, %v173
    %v175 = vpop.f32.mrb[0].mxu0
    %v176 = vpop.f32.mrb[0].mxu0
    %v177 = vadd.f32 %v66, %v176
    %v178 = vpop.f32.mrb[0].mxu0
    %179 = vmatprep.mubr.bf16.mxu0 0
    %180 = vmatmul.mubr.bf16.gmra.mrb[0].mxu0 %v94
    %v181 = vpop.f32.mrb[0].mxu0
    %v182 = vadd.f32 %v66, %v181
    %v183 = vpop.f32.mrb[0].mxu0
    %v184 = vpop.f32.mrb[0].mxu0
    %v185 = vadd.f32 %v66, %v184
    %v186 = vpop.f32.mrb[0].mxu0
    %187 = vmatprep.mubr.bf16.mxu0 0
    %188 = vmatmul.mubr.bf16.gmra.mrb[0].mxu0 %v97
    %v189 = vpop.f32.mrb[0].mxu0
    %v190 = vadd.f32 %v66, %v189
    %v191 = vpop.f32.mrb[0].mxu0
    %v192 = vpop.f32.mrb[0].mxu0
    %v193 = vadd.f32 %v66, %v192
    %v194 = vpop.f32.mrb[0].mxu0
    %195 = vdwg.mxu0
    %v196 = vmax.f32 %v134, 0.0
    %v197 = vmax.f32 %v137, 0.0
    %v198 = vmax.f32 %v142, 0.0
    %v199 = vmax.f32 %v145, 0.0
    %v200 = vmax.f32 %v150, 0.0
    %v201 = vmax.f32 %v153, 0.0
    %v202 = vmax.f32 %v158, 0.0
    %v203 = vmax.f32 %v161, 0.0
    %v204 = vmax.f32 %v166, 0.0
    %v205 = vmax.f32 %v169, 0.0
    %v206 = vmax.f32 %v174, 0.0
    %v207 = vmax.f32 %v177, 0.0
    %v208 = vmax.f32 %v182, 0.0
    %v209 = vmax.f32 %v185, 0.0
    %v210 = vmax.f32 %v190, 0.0
    %v211 = vmax.f32 %v193, 0.0
    %v212 = vpack.c.bf16 %v197, %v196
    %v213 = vpack.c.bf16 %v199, %v198
    %v214 = vpack.c.bf16 %v201, %v200
    %v215 = vpack.c.bf16 %v203, %v202
    %v216 = vpack.c.bf16 %v205, %v204
    %v217 = vpack.c.bf16 %v207, %v206
    %v218 = vpack.c.bf16 %v209, %v208
    %v219 = vpack.c.bf16 %v211, %v210
    %v220 = vld [vmem:[%s3] sm:$0xf]
    %v221 = vld [vmem:[%s3 + $0x4] sm:$0xf]
    %v222 = vld [vmem:[%s3 + $0x8] sm:$0xf]
    %v223 = vld [vmem:[%s3 + $0xc] sm:$0xf]
    %v224 = vld [vmem:[%s3 + $0x10] sm:$0xf]
    %v225 = vld [vmem:[%s3 + $0x14] sm:$0xf]
    %v226 = vld [vmem:[%s3 + $0x18] sm:$0xf]
    %v227 = vld [vmem:[%s3 + $0x1c] sm:$0xf]
    %v228 = vld [vmem:[%s3 + $0x20] sm:$0xf]
    %v229 = vld [vmem:[%s3 + $0x24] sm:$0xf]
    %v230 = vld [vmem:[%s3 + $0x28] sm:$0xf]
    %v231 = vld [vmem:[%s3 + $0x2c] sm:$0xf]
    %v232 = vld [vmem:[%s3 + $0x30] sm:$0xf]
    %v233 = vld [vmem:[%s3 + $0x34] sm:$0xf]
    %v234 = vld [vmem:[%s3 + $0x38] sm:$0xf]
    %v235 = vld [vmem:[%s3 + $0x3c] sm:$0xf]
    %v236 = vld [vmem:[%s4] sm:$0x1]
    %v238 = vlaneseq
    %v239 = vshrl.u32 %v238, 7
    %v240 = vsub.s32 0, %v239
    %v241 = vrot.slane %v236, %v240
    %v259 = vunpack.c.l.b16 %v220
    %v260 = vunpack.c.l.b16 %v221
    %v261 = vunpack.c.l.b16 %v222
    %v262 = vunpack.c.l.b16 %v223
    %v263 = vunpack.c.l.b16 %v224
    %v264 = vunpack.c.l.b16 %v225
    %v265 = vunpack.c.l.b16 %v226
    %v266 = vunpack.c.l.b16 %v227
    %v267 = vunpack.c.l.b16 %v228
    %v268 = vunpack.c.l.b16 %v229
    %v269 = vunpack.c.l.b16 %v230
    %v270 = vunpack.c.l.b16 %v231
    %v271 = vunpack.c.l.b16 %v232
    %v272 = vunpack.c.l.b16 %v233
    %v273 = vunpack.c.l.b16 %v234
    %v274 = vunpack.c.l.b16 %v235
    %v275 = vpack.c.b16 %v260, %v259
    %v276 = vpack.c.b16 %v262, %v261
    %v277 = vpack.c.b16 %v264, %v263
    %v278 = vpack.c.b16 %v266, %v265
    %v279 = vpack.c.b16 %v268, %v267
    %v280 = vpack.c.b16 %v270, %v269
    %v281 = vpack.c.b16 %v272, %v271
    %v282 = vpack.c.b16 %v274, %v273
    %291 = vmatprep.subr.bf16.mxu0 0
    %292 = vmatpush1.bf16.msra.mxu0 %v275
    %293 = vmatprep.subr.bf16.mxu0 0
    %294 = vmatpush1.bf16.msra.mxu0 %v276
    %295 = vmatprep.subr.bf16.mxu0 0
    %296 = vmatpush1.bf16.msra.mxu0 %v277
    %297 = vmatprep.subr.bf16.mxu0 0
    %298 = vmatpush1.bf16.msra.mxu0 %v278
    %299 = vmatprep.subr.bf16.mxu0 0
    %300 = vmatpush1.bf16.msra.mxu0 %v279
    %301 = vmatprep.subr.bf16.mxu0 0
    %302 = vmatpush1.bf16.msra.mxu0 %v280
    %303 = vmatprep.subr.bf16.mxu0 0
    %304 = vmatpush1.bf16.msra.mxu0 %v281
    %305 = vmatprep.subr.bf16.mxu0 0
    %306 = vmatpush1.bf16.msra.mxu0 %v282
    %307 = vmatprep.subr.bf16.mxu0 0
    %308 = vmatpush1.bf16.msra.mxu0 0
    %309 = vmatprep.subr.bf16.mxu0 0
    %310 = vmatpush1.bf16.msra.mxu0 0
    %311 = vmatprep.subr.bf16.mxu0 0
    %312 = vmatpush1.bf16.msra.mxu0 0
    %313 = vmatprep.subr.bf16.mxu0 0
    %314 = vmatpush1.bf16.msra.mxu0 0
    %315 = vmatprep.subr.bf16.mxu0 0
    %316 = vmatpush1.bf16.msra.mxu0 0
    %317 = vmatprep.subr.bf16.mxu0 0
    %318 = vmatpush1.bf16.msra.mxu0 0
    %319 = vmatprep.subr.bf16.mxu0 0
    %320 = vmatpush1.bf16.msra.mxu0 0
    %321 = vmatprep.subr.bf16.mxu0 0
    %322 = vmatpush1.bf16.msra.mxu0 0
    %323 = vmatprep.mubr.bf16.mxu0 0
    %324 = vmatmul.mubr.bf16.gmra.mrb[0].mxu0 %v212
    %v325 = vpop.f32.mrb[0].mxu0
    %v326 = vadd.f32 %v241, %v325
    %v327 = vpop.f32.mrb[0].mxu0
    %v328 = vpop.f32.mrb[0].mxu0
    %v329 = vadd.f32 %v241, %v328
    %v330 = vpop.f32.mrb[0].mxu0
    %331 = vmatprep.mubr.bf16.mxu0 0
    %332 = vmatmul.mubr.bf16.gmra.mrb[0].mxu0 %v213
    %v333 = vpop.f32.mrb[0].mxu0
    %v334 = vadd.f32 %v241, %v333
    %v335 = vpop.f32.mrb[0].mxu0
    %v336 = vpop.f32.mrb[0].mxu0
    %v337 = vadd.f32 %v241, %v336
    %v338 = vpop.f32.mrb[0].mxu0
    %339 = vmatprep.mubr.bf16.mxu0 0
    %340 = vmatmul.mubr.bf16.gmra.mrb[0].mxu0 %v214
    %v341 = vpop.f32.mrb[0].mxu0
    %v342 = vadd.f32 %v241, %v341
    %v343 = vpop.f32.mrb[0].mxu0
    %v344 = vpop.f32.mrb[0].mxu0
    %v345 = vadd.f32 %v241, %v344
    %v346 = vpop.f32.mrb[0].mxu0
    %347 = vmatprep.mubr.bf16.mxu0 0
    %348 = vmatmul.mubr.bf16.gmra.mrb[0].mxu0 %v215
    %v349 = vpop.f32.mrb[0].mxu0
    %v350 = vadd.f32 %v241, %v349
    %v351 = vpop.f32.mrb[0].mxu0
    %v352 = vpop.f32.mrb[0].mxu0
    %v353 = vadd.f32 %v241, %v352
    %v354 = vpop.f32.mrb[0].mxu0
    %355 = vmatprep.mubr.bf16.mxu0 0
    %356 = vmatmul.mubr.bf16.gmra.mrb[0].mxu0 %v216
    %v357 = vpop.f32.mrb[0].mxu0
    %v358 = vadd.f32 %v241, %v357
    %v359 = vpop.f32.mrb[0].mxu0
    %v360 = vpop.f32.mrb[0].mxu0
    %v361 = vadd.f32 %v241, %v360
    %v362 = vpop.f32.mrb[0].mxu0
    %363 = vmatprep.mubr.bf16.mxu0 0
    %364 = vmatmul.mubr.bf16.gmra.mrb[0].mxu0 %v217
    %v365 = vpop.f32.mrb[0].mxu0
    %v366 = vadd.f32 %v241, %v365
    %v367 = vpop.f32.mrb[0].mxu0
    %v368 = vpop.f32.mrb[0].mxu0
    %v369 = vadd.f32 %v241, %v368
    %v370 = vpop.f32.mrb[0].mxu0
    %371 = vmatprep.mubr.bf16.mxu0 0
    %372 = vmatmul.mubr.bf16.gmra.mrb[0].mxu0 %v218
    %v373 = vpop.f32.mrb[0].mxu0
    %v374 = vadd.f32 %v241, %v373
    %v375 = vpop.f32.mrb[0].mxu0
    %v376 = vpop.f32.mrb[0].mxu0
    %v377 = vadd.f32 %v241, %v376
    %v378 = vpop.f32.mrb[0].mxu0
    %379 = vmatprep.mubr.bf16.mxu0 0
    %380 = vmatmul.mubr.bf16.gmra.mrb[0].mxu0 %v219
    %v381 = vpop.f32.mrb[0].mxu0
    %v382 = vadd.f32 %v241, %v381
    %v383 = vpop.f32.mrb[0].mxu0
    %v384 = vpop.f32.mrb[0].mxu0
    %v385 = vadd.f32 %v241, %v384
    %v386 = vpop.f32.mrb[0].mxu0
    %387 = vdwg.mxu0
    %v388 = vmax.f32 %v326, 0.0
    %v389 = vmax.f32 %v329, 0.0
    %v390 = vmax.f32 %v334, 0.0
    %v391 = vmax.f32 %v337, 0.0
    %v392 = vmax.f32 %v342, 0.0
    %v393 = vmax.f32 %v345, 0.0
    %v394 = vmax.f32 %v350, 0.0
    %v395 = vmax.f32 %v353, 0.0
    %v396 = vmax.f32 %v358, 0.0
    %v397 = vmax.f32 %v361, 0.0
    %v398 = vmax.f32 %v366, 0.0
    %v399 = vmax.f32 %v369, 0.0
    %v400 = vmax.f32 %v374, 0.0
    %v401 = vmax.f32 %v377, 0.0
    %v402 = vmax.f32 %v382, 0.0
    %v403 = vmax.f32 %v385, 0.0
    %v404 = vpack.c.bf16 %v389, %v388
    %v405 = vpack.c.bf16 %v391, %v390
    %v406 = vpack.c.bf16 %v393, %v392
    %v407 = vpack.c.bf16 %v395, %v394
    %v408 = vpack.c.bf16 %v397, %v396
    %v409 = vpack.c.bf16 %v399, %v398
    %v410 = vpack.c.bf16 %v401, %v400
    %v411 = vpack.c.bf16 %v403, %v402
    %v412 = vld [vmem:[%s5] sm:$0xf]
    %v413 = vld [vmem:[%s5 + $0x4] sm:$0xf]
    %v414 = vld [vmem:[%s5 + $0x8] sm:$0xf]
    %v415 = vld [vmem:[%s5 + $0xc] sm:$0xf]
    %v416 = vld [vmem:[%s5 + $0x10] sm:$0xf]
    %v417 = vld [vmem:[%s5 + $0x14] sm:$0xf]
    %v418 = vld [vmem:[%s5 + $0x18] sm:$0xf]
    %v419 = vld [vmem:[%s5 + $0x1c] sm:$0xf]
    %v420 = vld [vmem:[%s5 + $0x20] sm:$0xf]
    %v421 = vld [vmem:[%s5 + $0x24] sm:$0xf]
    %v422 = vld [vmem:[%s5 + $0x28] sm:$0xf]
    %v423 = vld [vmem:[%s5 + $0x2c] sm:$0xf]
    %v424 = vld [vmem:[%s5 + $0x30] sm:$0xf]
    %v425 = vld [vmem:[%s5 + $0x34] sm:$0xf]
    %v426 = vld [vmem:[%s5 + $0x38] sm:$0xf]
    %v427 = vld [vmem:[%s5 + $0x3c] sm:$0xf]
    %v428 = vld [vmem:[%s6] sm:$0x1]
    %v430 = vlaneseq
    %v431 = vshrl.u32 %v430, 7
    %v432 = vsub.s32 0, %v431
    %v433 = vrot.slane %v428, %v432
    %v451 = vunpack.c.l.b16 %v412
    %v452 = vunpack.c.l.b16 %v413
    %v453 = vunpack.c.l.b16 %v414
    %v454 = vunpack.c.l.b16 %v415
    %v455 = vunpack.c.l.b16 %v416
    %v456 = vunpack.c.l.b16 %v417
    %v457 = vunpack.c.l.b16 %v418
    %v458 = vunpack.c.l.b16 %v419
    %v459 = vunpack.c.l.b16 %v420
    %v460 = vunpack.c.l.b16 %v421
    %v461 = vunpack.c.l.b16 %v422
    %v462 = vunpack.c.l.b16 %v423
    %v463 = vunpack.c.l.b16 %v424
    %v464 = vunpack.c.l.b16 %v425
    %v465 = vunpack.c.l.b16 %v426
    %v466 = vunpack.c.l.b16 %v427
    %v467 = vpack.c.b16 %v452, %v451
    %v468 = vpack.c.b16 %v454, %v453
    %v469 = vpack.c.b16 %v456, %v455
    %v470 = vpack.c.b16 %v458, %v457
    %v471 = vpack.c.b16 %v460, %v459
    %v472 = vpack.c.b16 %v462, %v461
    %v473 = vpack.c.b16 %v464, %v463
    %v474 = vpack.c.b16 %v466, %v465
    %483 = vmatprep.subr.bf16.mxu0 0
    %484 = vmatpush1.bf16.msra.mxu0 %v467
    %485 = vmatprep.subr.bf16.mxu0 0
    %486 = vmatpush1.bf16.msra.mxu0 %v468
    %487 = vmatprep.subr.bf16.mxu0 0
    %488 = vmatpush1.bf16.msra.mxu0 %v469
    %489 = vmatprep.subr.bf16.mxu0 0
    %490 = vmatpush1.bf16.msra.mxu0 %v470
    %491 = vmatprep.subr.bf16.mxu0 0
    %492 = vmatpush1.bf16.msra.mxu0 %v471
    %493 = vmatprep.subr.bf16.mxu0 0
    %494 = vmatpush1.bf16.msra.mxu0 %v472
    %495 = vmatprep.subr.bf16.mxu0 0
    %496 = vmatpush1.bf16.msra.mxu0 %v473
    %497 = vmatprep.subr.bf16.mxu0 0
    %498 = vmatpush1.bf16.msra.mxu0 %v474
    %499 = vmatprep.subr.bf16.mxu0 0
    %500 = vmatpush1.bf16.msra.mxu0 0
    %501 = vmatprep.subr.bf16.mxu0 0
    %502 = vmatpush1.bf16.msra.mxu0 0
    %503 = vmatprep.subr.bf16.mxu0 0
    %504 = vmatpush1.bf16.msra.mxu0 0
    %505 = vmatprep.subr.bf16.mxu0 0
    %506 = vmatpush1.bf16.msra.mxu0 0
    %507 = vmatprep.subr.bf16.mxu0 0
    %508 = vmatpush1.bf16.msra.mxu0 0
    %509 = vmatprep.subr.bf16.mxu0 0
    %510 = vmatpush1.bf16.msra.mxu0 0
    %511 = vmatprep.subr.bf16.mxu0 0
    %512 = vmatpush1.bf16.msra.mxu0 0
    %513 = vmatprep.subr.bf16.mxu0 0
    %514 = vmatpush1.bf16.msra.mxu0 0
    %515 = vmatprep.mubr.bf16.mxu0 0
    %516 = vmatmul.mubr.bf16.gmra.mrb[0].mxu0 %v404
    %v517 = vpop.f32.mrb[0].mxu0
    %v518 = vadd.f32 %v433, %v517
    %v519 = vpop.f32.mrb[0].mxu0
    %v520 = vpop.f32.mrb[0].mxu0
    %v521 = vadd.f32 %v433, %v520
    %v522 = vpop.f32.mrb[0].mxu0
    %523 = vmatprep.mubr.bf16.mxu0 0
    %524 = vmatmul.mubr.bf16.gmra.mrb[0].mxu0 %v405
    %v525 = vpop.f32.mrb[0].mxu0
    %v526 = vadd.f32 %v433, %v525
    %v527 = vpop.f32.mrb[0].mxu0
    %v528 = vpop.f32.mrb[0].mxu0
    %v529 = vadd.f32 %v433, %v528
    %v530 = vpop.f32.mrb[0].mxu0
    %531 = vmatprep.mubr.bf16.mxu0 0
    %532 = vmatmul.mubr.bf16.gmra.mrb[0].mxu0 %v406
    %v533 = vpop.f32.mrb[0].mxu0
    %v534 = vadd.f32 %v433, %v533
    %v535 = vpop.f32.mrb[0].mxu0
    %v536 = vpop.f32.mrb[0].mxu0
    %v537 = vadd.f32 %v433, %v536
    %v538 = vpop.f32.mrb[0].mxu0
    %539 = vmatprep.mubr.bf16.mxu0 0
    %540 = vmatmul.mubr.bf16.gmra.mrb[0].mxu0 %v407
    %v541 = vpop.f32.mrb[0].mxu0
    %v542 = vadd.f32 %v433, %v541
    %v543 = vpop.f32.mrb[0].mxu0
    %v544 = vpop.f32.mrb[0].mxu0
    %v545 = vadd.f32 %v433, %v544
    %v546 = vpop.f32.mrb[0].mxu0
    %547 = vmatprep.mubr.bf16.mxu0 0
    %548 = vmatmul.mubr.bf16.gmra.mrb[0].mxu0 %v408
    %v549 = vpop.f32.mrb[0].mxu0
    %v550 = vadd.f32 %v433, %v549
    %v551 = vpop.f32.mrb[0].mxu0
    %v552 = vpop.f32.mrb[0].mxu0
    %v553 = vadd.f32 %v433, %v552
    %v554 = vpop.f32.mrb[0].mxu0
    %555 = vmatprep.mubr.bf16.mxu0 0
    %556 = vmatmul.mubr.bf16.gmra.mrb[0].mxu0 %v409
    %v557 = vpop.f32.mrb[0].mxu0
    %v558 = vadd.f32 %v433, %v557
    %v559 = vpop.f32.mrb[0].mxu0
    %v560 = vpop.f32.mrb[0].mxu0
    %v561 = vadd.f32 %v433, %v560
    %v562 = vpop.f32.mrb[0].mxu0
    %563 = vmatprep.mubr.bf16.mxu0 0
    %564 = vmatmul.mubr.bf16.gmra.mrb[0].mxu0 %v410
    %v565 = vpop.f32.mrb[0].mxu0
    %v566 = vadd.f32 %v433, %v565
    %v567 = vpop.f32.mrb[0].mxu0
    %v568 = vpop.f32.mrb[0].mxu0
    %v569 = vadd.f32 %v433, %v568
    %v570 = vpop.f32.mrb[0].mxu0
    %571 = vmatprep.mubr.bf16.mxu0 0
    %572 = vmatmul.mubr.bf16.gmra.mrb[0].mxu0 %v411
    %v573 = vpop.f32.mrb[0].mxu0
    %v574 = vadd.f32 %v433, %v573
    %v575 = vpop.f32.mrb[0].mxu0
    %v576 = vpop.f32.mrb[0].mxu0
    %v577 = vadd.f32 %v433, %v576
    %v578 = vpop.f32.mrb[0].mxu0
    %579 = vdwg.mxu0
    %v580 = vmax.f32 %v518, 0.0
    %v581 = vmax.f32 %v521, 0.0
    %v582 = vmax.f32 %v526, 0.0
    %v583 = vmax.f32 %v529, 0.0
    %v584 = vmax.f32 %v534, 0.0
    %v585 = vmax.f32 %v537, 0.0
    %v586 = vmax.f32 %v542, 0.0
    %v587 = vmax.f32 %v545, 0.0
    %v588 = vmax.f32 %v550, 0.0
    %v589 = vmax.f32 %v553, 0.0
    %v590 = vmax.f32 %v558, 0.0
    %v591 = vmax.f32 %v561, 0.0
    %v592 = vmax.f32 %v566, 0.0
    %v593 = vmax.f32 %v569, 0.0
    %v594 = vmax.f32 %v574, 0.0
    %v595 = vmax.f32 %v577, 0.0
    %v596 = vpack.c.bf16 %v581, %v580
    %v597 = vpack.c.bf16 %v583, %v582
    %v598 = vpack.c.bf16 %v585, %v584
    %v599 = vpack.c.bf16 %v587, %v586
    %v600 = vpack.c.bf16 %v589, %v588
    %v601 = vpack.c.bf16 %v591, %v590
    %v602 = vpack.c.bf16 %v593, %v592
    %v603 = vpack.c.bf16 %v595, %v594
    %v604 = vunpack.c.l.bf16 %v596
    %v605 = vunpack.c.h.bf16 %v596
    %v606 = vunpack.c.l.bf16 %v597
    %v607 = vunpack.c.h.bf16 %v597
    %v608 = vunpack.c.l.bf16 %v598
    %v609 = vunpack.c.h.bf16 %v598
    %v610 = vunpack.c.l.bf16 %v599
    %v611 = vunpack.c.h.bf16 %v599
    %v612 = vunpack.c.l.bf16 %v600
    %v613 = vunpack.c.h.bf16 %v600
    %v614 = vunpack.c.l.bf16 %v601
    %v615 = vunpack.c.h.bf16 %v601
    %v616 = vunpack.c.l.bf16 %v602
    %v617 = vunpack.c.h.bf16 %v602
    %v618 = vunpack.c.l.bf16 %v603
    %v619 = vunpack.c.h.bf16 %v603
    %v620 = vld [vmem:[%s7] sm:$0x1]
    %v622 = vlaneseq
    %v623 = vshrl.u32 %v622, 7
    %v624 = vsub.s32 0, %v623
    %v625 = vrot.slane %v620, %v624
    %v627 = vmul.f32 %v604, %v625
    %v628 = vmul.f32 %v605, %v625
    %v629 = vmul.f32 %v606, %v625
    %v630 = vmul.f32 %v607, %v625
    %v631 = vmul.f32 %v608, %v625
    %v632 = vmul.f32 %v609, %v625
    %v633 = vmul.f32 %v610, %v625
    %v634 = vmul.f32 %v611, %v625
    %v635 = vmul.f32 %v612, %v625
    %v636 = vmul.f32 %v613, %v625
    %v637 = vmul.f32 %v614, %v625
    %v638 = vmul.f32 %v615, %v625
    %v639 = vmul.f32 %v616, %v625
    %v640 = vmul.f32 %v617, %v625
    %v641 = vmul.f32 %v618, %v625
    %v642 = vmul.f32 %v619, %v625
    %643 = vadd.xlane.f32.xlu0 %v627
    %v644 = vpop.xlane.xlu0 %643
    %645 = vadd.xlane.f32.xlu0 %v628
    %v646 = vpop.xlane.xlu0 %645
    %647 = vadd.xlane.f32.xlu0 %v629
    %v648 = vpop.xlane.xlu0 %647
    %649 = vadd.xlane.f32.xlu0 %v630
    %v650 = vpop.xlane.xlu0 %649
    %651 = vadd.xlane.f32.xlu0 %v631
    %v652 = vpop.xlane.xlu0 %651
    %653 = vadd.xlane.f32.xlu0 %v632
    %v654 = vpop.xlane.xlu0 %653
    %655 = vadd.xlane.f32.xlu0 %v633
    %v656 = vpop.xlane.xlu0 %655
    %657 = vadd.xlane.f32.xlu0 %v634
    %v658 = vpop.xlane.xlu0 %657
    %659 = vadd.xlane.f32.xlu0 %v635
    %v660 = vpop.xlane.xlu0 %659
    %661 = vadd.xlane.f32.xlu0 %v636
    %v662 = vpop.xlane.xlu0 %661
    %663 = vadd.xlane.f32.xlu0 %v637
    %v664 = vpop.xlane.xlu0 %663
    %665 = vadd.xlane.f32.xlu0 %v638
    %v666 = vpop.xlane.xlu0 %665
    %667 = vadd.xlane.f32.xlu0 %v639
    %v668 = vpop.xlane.xlu0 %667
    %669 = vadd.xlane.f32.xlu0 %v640
    %v670 = vpop.xlane.xlu0 %669
    %671 = vadd.xlane.f32.xlu0 %v641
    %v672 = vpop.xlane.xlu0 %671
    %673 = vadd.xlane.f32.xlu0 %v642
    %v674 = vpop.xlane.xlu0 %673
    %s675 = sld [smem:[#allocation2]]
    %v676 = vstv %s675
    %v677 = vadd.f32 %v644, %v676
    %v678 = vadd.f32 %v646, %v676
    %v679 = vadd.f32 %v648, %v676
    %v680 = vadd.f32 %v650, %v676
    %v681 = vadd.f32 %v652, %v676
    %v682 = vadd.f32 %v654, %v676
    %v683 = vadd.f32 %v656, %v676
    %v684 = vadd.f32 %v658, %v676
    %v685 = vadd.f32 %v660, %v676
    %v686 = vadd.f32 %v662, %v676
    %v687 = vadd.f32 %v664, %v676
    %v688 = vadd.f32 %v666, %v676
    %v689 = vadd.f32 %v668, %v676
    %v690 = vadd.f32 %v670, %v676
    %v691 = vadd.f32 %v672, %v676
    %v692 = vadd.f32 %v674, %v676
    %v709 = vlaneseq
    %v710 = vand.u32 %v709, 127
    %v711 = vlaneseq
    %v712 = vshrl.u32 %v711, 7
    %v713 = vsub.s32 %v710, %v712
    %v714 = vrot.slane %v677, %v713
    %v715 = vadd.s32 %v710, 4294967288
    %v716 = vlaneseq
    %v717 = vshrl.u32 %v716, 7
    %v718 = vsub.s32 %v715, %v717
    %v719 = vrot.slane %v678, %v718
    %vm720 = vcmask 130112
    %v721 = vsel %vm720, %v719, %v714
    %v722 = vadd.s32 %v710, 4294967280
    %v723 = vlaneseq
    %v724 = vshrl.u32 %v723, 7
    %v725 = vsub.s32 %v722, %v724
    %v726 = vrot.slane %v679, %v725
    %vm727 = vcmask 195712
    %v728 = vsel %vm727, %v726, %v721
    %v729 = vadd.s32 %v710, 4294967272
    %v730 = vlaneseq
    %v731 = vshrl.u32 %v730, 7
    %v732 = vsub.s32 %v729, %v731
    %v733 = vrot.slane %v680, %v732
    %vm734 = vcmask 261312
    %v735 = vsel %vm734, %v733, %v728
    %v736 = vadd.s32 %v710, 4294967264
    %v737 = vlaneseq
    %v738 = vshrl.u32 %v737, 7
    %v739 = vsub.s32 %v736, %v738
    %v740 = vrot.slane %v681, %v739
    %vm741 = vcmask 326912
    %v742 = vsel %vm741, %v740, %v735
    %v743 = vadd.s32 %v710, 4294967256
    %v744 = vlaneseq
    %v745 = vshrl.u32 %v744, 7
    %v746 = vsub.s32 %v743, %v745
    %v747 = vrot.slane %v682, %v746
    %vm748 = vcmask 392512
    %v749 = vsel %vm748, %v747, %v742
    %v750 = vadd.s32 %v710, 4294967248
    %v751 = vlaneseq
    %v752 = vshrl.u32 %v751, 7
    %v753 = vsub.s32 %v750, %v752
    %v754 = vrot.slane %v683, %v753
    %vm755 = vcmask 458112
    %v756 = vsel %vm755, %v754, %v749
    %v757 = vadd.s32 %v710, 4294967240
    %v758 = vlaneseq
    %v759 = vshrl.u32 %v758, 7
    %v760 = vsub.s32 %v757, %v759
    %v761 = vrot.slane %v684, %v760
    %vm762 = vcmask 523712
    %v763 = vsel %vm762, %v761, %v756
    %v764 = vadd.s32 %v710, 4294967232
    %v765 = vlaneseq
    %v766 = vshrl.u32 %v765, 7
    %v767 = vsub.s32 %v764, %v766
    %v768 = vrot.slane %v685, %v767
    %vm769 = vcmask 589312
    %v770 = vsel %vm769, %v768, %v763
    %v771 = vadd.s32 %v710, 4294967224
    %v772 = vlaneseq
    %v773 = vshrl.u32 %v772, 7
    %v774 = vsub.s32 %v771, %v773
    %v775 = vrot.slane %v686, %v774
    %vm776 = vcmask 654912
    %v777 = vsel %vm776, %v775, %v770
    %v778 = vadd.s32 %v710, 4294967216
    %v779 = vlaneseq
    %v780 = vshrl.u32 %v779, 7
    %v781 = vsub.s32 %v778, %v780
    %v782 = vrot.slane %v687, %v781
    %vm783 = vcmask 720512
    %v784 = vsel %vm783, %v782, %v777
    %v785 = vadd.s32 %v710, 4294967208
    %v786 = vlaneseq
    %v787 = vshrl.u32 %v786, 7
    %v788 = vsub.s32 %v785, %v787
    %v789 = vrot.slane %v688, %v788
    %vm790 = vcmask 786112
    %v791 = vsel %vm790, %v789, %v784
    %v792 = vadd.s32 %v710, 4294967200
    %v793 = vlaneseq
    %v794 = vshrl.u32 %v793, 7
    %v795 = vsub.s32 %v792, %v794
    %v796 = vrot.slane %v689, %v795
    %vm797 = vcmask 851712
    %v798 = vsel %vm797, %v796, %v791
    %v799 = vadd.s32 %v710, 4294967192
    %v800 = vlaneseq
    %v801 = vshrl.u32 %v800, 7
    %v802 = vsub.s32 %v799, %v801
    %v803 = vrot.slane %v690, %v802
    %vm804 = vcmask 917312
    %v805 = vsel %vm804, %v803, %v798
    %v806 = vadd.s32 %v710, 4294967184
    %v807 = vlaneseq
    %v808 = vshrl.u32 %v807, 7
    %v809 = vsub.s32 %v806, %v808
    %v810 = vrot.slane %v691, %v809
    %vm811 = vcmask 982912
    %v812 = vsel %vm811, %v810, %v805
    %v813 = vadd.s32 %v710, 4294967176
    %v814 = vlaneseq
    %v815 = vshrl.u32 %v814, 7
    %v816 = vsub.s32 %v813, %v815
    %v817 = vrot.slane %v692, %v816
    %vm818 = vcmask 1048512
    %v819 = vsel %vm818, %v817, %v812
    %821 = vst [vmem:[#allocation3] sm:$0x1] %v819
    // Predicated region
    $region38: #{tpu_custom_call.1} parent=1 // pred_check
      _
    $region39: #{tpu_custom_call.1} parent=1 // pred_check_branch
      %823 = sbr.rel (0) target = $region41
    $region40: #{tpu_custom_call.1} parent=1 // pred_region
      %s825 = ssub.s32 16, 16
      %826 = vsyncadd [#allocation4], %s825
      %s828 = sshll.u32 [#allocation3], 4
      %s829 = int_to_ptr.vmem [resolvable:$true] %s828
      %831 = dma.vmem_to_hbm [thread:$0]  %s829, 16, %s9, [#allocation4]
    $region41: #{tpu_custom_call.1} parent=1 // pred_fallthru
      _
    // Predicated region
    $region42: #{tpu_custom_call.1} parent=1 // pred_check
      _
    $region43: #{tpu_custom_call.1} parent=1 // pred_check_branch
      %833 = sbr.rel (0) target = $region45
    $region44: #{tpu_custom_call.1} parent=1 // pred_region
      %834 = dma.done [#allocation4], 16
    $region45: #{tpu_custom_call.1} parent=1 // pred_fallthru
      _
    %835 = vsyncpa [#allocation4], 1

// kernel: tpu_custom_call.1
$region0: #{tpu_custom_call.1}
  #allocation0 [shape = 'u32[]', space=smem, size = 0x4, offset = 0x4, fixed_abs, tag = 'smem constant byte address 0x4 - core index']
  #allocation1 [shape = 'u32[144,128]{1,0:T(1,128)}', space=vmem, size = 0x12000, scoped, tag = 'internal scratch']
  #allocation2 [shape = 'f32[1,1]{1,0:T(1,128)S(6)}', space=smem, size = 0x200, scoped, tag = 'scoped memory for tpu_custom_call.1']
  %s0 = inlined_call_operand.vmem [shape: f32[128,16], index: 0, kind: input, shape index: {}]
  %s1 = inlined_call_operand.vmem [shape: bf16[16,128], index: 1, kind: input, shape index: {}]
  %s2 = inlined_call_operand.vmem [shape: f32[1,128], index: 2, kind: input, shape index: {}]
  %s3 = inlined_call_operand.vmem [shape: bf16[128,128], index: 3, kind: input, shape index: {}]
  %s4 = inlined_call_operand.vmem [shape: f32[1,128], index: 4, kind: input, shape index: {}]
  %s5 = inlined_call_operand.vmem [shape: bf16[128,128], index: 5, kind: input, shape index: {}]
  %s6 = inlined_call_operand.vmem [shape: f32[1,128], index: 6, kind: input, shape index: {}]
  %s7 = inlined_call_operand.vmem [shape: f32[1,128], index: 7, kind: input, shape index: {}]
  %s8 = inlined_call_operand.<no memory space> [shape: f32[1,1], index: 8, kind: input, shape index: {}]
  %s9 = inlined_call_operand.hbm [shape: f32[1,128], index: 9, kind: output, shape index: {}]
  %s10 = sld [smem:[#allocation0]]
  $region46: #{tpu_custom_call.1} parent=0
    _
  %s12 = ssub.s32 1, %s10
  %s13 = scalar_select 0, %s12, %s10
  %14 = sst [smem:[#allocation2]] %s8
  $region1: #{tpu_custom_call.1} parent=0
    #allocation3 [shape = 'u8[512]{0}', space=vmem, size = 0x400, scoped, tag = 'output window, operand 0, single buffered']
    #allocation4 [shape = 's32[1]{0}', space=sflag, size = 0x4, scoped, tag = 'scoped memory for tpu_custom_call.1']
    %15 = vsyncpa [#allocation4], 0
    // Predicated region
    $region2: #{tpu_custom_call.1} parent=1 // pred_check
      _
    $region3: #{tpu_custom_call.1} parent=1 // pred_check_branch
      %17 = sbr.rel (0) target = $region5
    $region4: #{tpu_custom_call.1} parent=1 // pred_region
      _
    $region5: #{tpu_custom_call.1} parent=1 // pred_fallthru
      _
    // Predicated region
    $region6: #{tpu_custom_call.1} parent=1 // pred_check
      _
    $region7: #{tpu_custom_call.1} parent=1 // pred_check_branch
      %19 = sbr.rel (0) target = $region9
    $region8: #{tpu_custom_call.1} parent=1 // pred_region
      _
    $region9: #{tpu_custom_call.1} parent=1 // pred_fallthru
      _
    // Predicated region
    $region10: #{tpu_custom_call.1} parent=1 // pred_check
      _
    $region11: #{tpu_custom_call.1} parent=1 // pred_check_branch
      %21 = sbr.rel (0) target = $region13
    $region12: #{tpu_custom_call.1} parent=1 // pred_region
      _
    $region13: #{tpu_custom_call.1} parent=1 // pred_fallthru
      _
    // Predicated region
    $region14: #{tpu_custom_call.1} parent=1 // pred_check
      _
    $region15: #{tpu_custom_call.1} parent=1 // pred_check_branch
      %23 = sbr.rel (0) target = $region17
    $region16: #{tpu_custom_call.1} parent=1 // pred_region
      _
    $region17: #{tpu_custom_call.1} parent=1 // pred_fallthru
      _
    // Predicated region
    $region18: #{tpu_custom_call.1} parent=1 // pred_check
      _
    $region19: #{tpu_custom_call.1} parent=1 // pred_check_branch
      %25 = sbr.rel (0) target = $region21
    $region20: #{tpu_custom_call.1} parent=1 // pred_region
      _
    $region21: #{tpu_custom_call.1} parent=1 // pred_fallthru
      _
    // Predicated region
    $region22: #{tpu_custom_call.1} parent=1 // pred_check
      _
    $region23: #{tpu_custom_call.1} parent=1 // pred_check_branch
      %27 = sbr.rel (0) target = $region25
    $region24: #{tpu_custom_call.1} parent=1 // pred_region
      _
    $region25: #{tpu_custom_call.1} parent=1 // pred_fallthru
      _
    // Predicated region
    $region26: #{tpu_custom_call.1} parent=1 // pred_check
      _
    $region27: #{tpu_custom_call.1} parent=1 // pred_check_branch
      %29 = sbr.rel (0) target = $region29
    $region28: #{tpu_custom_call.1} parent=1 // pred_region
      _
    $region29: #{tpu_custom_call.1} parent=1 // pred_fallthru
      _
    // Predicated region
    $region30: #{tpu_custom_call.1} parent=1 // pred_check
      _
    $region31: #{tpu_custom_call.1} parent=1 // pred_check_branch
      %31 = sbr.rel (0) target = $region33
    $region32: #{tpu_custom_call.1} parent=1 // pred_region
      _
    $region33: #{tpu_custom_call.1} parent=1 // pred_fallthru
      _
    // Predicated region
    $region34: #{tpu_custom_call.1} parent=1 // pred_check
      _
    $region35: #{tpu_custom_call.1} parent=1 // pred_check_branch
      %33 = sbr.rel (0) target = $region37
    $region36: #{tpu_custom_call.1} parent=1 // pred_region
      _
    $region37: #{tpu_custom_call.1} parent=1 // pred_fallthru
      _
    %v35 = vld [vmem:[%s0] sm:$0xff]
    %v36 = vld [vmem:[%s0 + $0x8] sm:$0xff]
    %v37 = vld [vmem:[%s0 + $0x10] sm:$0xff]
    %v38 = vld [vmem:[%s0 + $0x18] sm:$0xff]
    %v39 = vld [vmem:[%s0 + $0x20] sm:$0xff]
    %v40 = vld [vmem:[%s0 + $0x28] sm:$0xff]
    %v41 = vld [vmem:[%s0 + $0x30] sm:$0xff]
    %v42 = vld [vmem:[%s0 + $0x38] sm:$0xff]
    %v43 = vld [vmem:[%s0 + $0x40] sm:$0xff]
    %v44 = vld [vmem:[%s0 + $0x48] sm:$0xff]
    %v45 = vld [vmem:[%s0 + $0x50] sm:$0xff]
    %v46 = vld [vmem:[%s0 + $0x58] sm:$0xff]
    %v47 = vld [vmem:[%s0 + $0x60] sm:$0xff]
    %v48 = vld [vmem:[%s0 + $0x68] sm:$0xff]
    %v49 = vld [vmem:[%s0 + $0x70] sm:$0xff]
    %v50 = vld [vmem:[%s0 + $0x78] sm:$0xff]
    %v51 = vpack.c.bf16 %v36, %v35
    %v52 = vpack.c.bf16 %v38, %v37
    %v53 = vpack.c.bf16 %v40, %v39
    %v54 = vpack.c.bf16 %v42, %v41
    %v55 = vpack.c.bf16 %v44, %v43
    %v56 = vpack.c.bf16 %v46, %v45
    %v57 = vpack.c.bf16 %v48, %v47
    %v58 = vpack.c.bf16 %v50, %v49
    %v59 = vld [vmem:[%s1] sm:$0xf]
    %v60 = vld [vmem:[%s1 + $0x4] sm:$0xf]
    %v61 = vld [vmem:[%s2] sm:$0x1]
    %v63 = vlaneseq
    %v64 = vshrl.u32 %v63, 7
    %v65 = vsub.s32 0, %v64
    %v66 = vrot.slane %v61, %v65
    %v70 = vunpack.c.l.b16 %v59
    %v71 = vunpack.c.l.b16 %v60
    %v72 = vpack.c.b16 %v71, %v70
    %vm74 = vcmask 130048
    %v76 = vsel %vm74, %v51, 0
    %v79 = vsel %vm74, %v52, 0
    %v82 = vsel %vm74, %v53, 0
    %v85 = vsel %vm74, %v54, 0
    %v88 = vsel %vm74, %v55, 0
    %v91 = vsel %vm74, %v56, 0
    %v94 = vsel %vm74, %v57, 0
    %v97 = vsel %vm74, %v58, 0
    %99 = vmatprep.subr.bf16.mxu0 0
    %100 = vmatpush1.bf16.msra.mxu0 %v72
    %101 = vmatprep.subr.bf16.mxu0 0
    %102 = vmatpush1.bf16.msra.mxu0 0
    %103 = vmatprep.subr.bf16.mxu0 0
    %104 = vmatpush1.bf16.msra.mxu0 0
    %105 = vmatprep.subr.bf16.mxu0 0
    %106 = vmatpush1.bf16.msra.mxu0 0
    %107 = vmatprep.subr.bf16.mxu0 0
    %108 = vmatpush1.bf16.msra.mxu0 0
    %109 = vmatprep.subr.bf16.mxu0 0
    %110 = vmatpush1.bf16.msra.mxu0 0
    %111 = vmatprep.subr.bf16.mxu0 0
    %112 = vmatpush1.bf16.msra.mxu0 0
    %113 = vmatprep.subr.bf16.mxu0 0
    %114 = vmatpush1.bf16.msra.mxu0 0
    %115 = vmatprep.subr.bf16.mxu0 0
    %116 = vmatpush1.bf16.msra.mxu0 0
    %117 = vmatprep.subr.bf16.mxu0 0
    %118 = vmatpush1.bf16.msra.mxu0 0
    %119 = vmatprep.subr.bf16.mxu0 0
    %120 = vmatpush1.bf16.msra.mxu0 0
    %121 = vmatprep.subr.bf16.mxu0 0
    %122 = vmatpush1.bf16.msra.mxu0 0
    %123 = vmatprep.subr.bf16.mxu0 0
    %124 = vmatpush1.bf16.msra.mxu0 0
    %125 = vmatprep.subr.bf16.mxu0 0
    %126 = vmatpush1.bf16.msra.mxu0 0
    %127 = vmatprep.subr.bf16.mxu0 0
    %128 = vmatpush1.bf16.msra.mxu0 0
    %129 = vmatprep.subr.bf16.mxu0 0
    %130 = vmatpush1.bf16.msra.mxu0 0
    %131 = vmatprep.mubr.bf16.mxu0 0
    %132 = vmatmul.mubr.bf16.gmra.mrb[0].mxu0 %v76
    %v133 = vpop.f32.mrb[0].mxu0
    %v134 = vadd.f32 %v66, %v133
    %v135 = vpop.f32.mrb[0].mxu0
    %v136 = vpop.f32.mrb[0].mxu0
    %v137 = vadd.f32 %v66, %v136
    %v138 = vpop.f32.mrb[0].mxu0
    %139 = vmatprep.mubr.bf16.mxu0 0
    %140 = vmatmul.mubr.bf16.gmra.mrb[0].mxu0 %v79
    %v141 = vpop.f32.mrb[0].mxu0
    %v142 = vadd.f32 %v66, %v141
    %v143 = vpop.f32.mrb[0].mxu0
    %v144 = vpop.f32.mrb[0].mxu0
    %v145 = vadd.f32 %v66, %v144
    %v146 = vpop.f32.mrb[0].mxu0
    %147 = vmatprep.mubr.bf16.mxu0 0
    %148 = vmatmul.mubr.bf16.gmra.mrb[0].mxu0 %v82
    %v149 = vpop.f32.mrb[0].mxu0
    %v150 = vadd.f32 %v66, %v149
    %v151 = vpop.f32.mrb[0].mxu0
    %v152 = vpop.f32.mrb[0].mxu0
    %v153 = vadd.f32 %v66, %v152
    %v154 = vpop.f32.mrb[0].mxu0
    %155 = vmatprep.mubr.bf16.mxu0 0
    %156 = vmatmul.mubr.bf16.gmra.mrb[0].mxu0 %v85
    %v157 = vpop.f32.mrb[0].mxu0
    %v158 = vadd.f32 %v66, %v157
    %v159 = vpop.f32.mrb[0].mxu0
    %v160 = vpop.f32.mrb[0].mxu0
    %v161 = vadd.f32 %v66, %v160
    %v162 = vpop.f32.mrb[0].mxu0
    %163 = vmatprep.mubr.bf16.mxu0 0
    %164 = vmatmul.mubr.bf16.gmra.mrb[0].mxu0 %v88
    %v165 = vpop.f32.mrb[0].mxu0
    %v166 = vadd.f32 %v66, %v165
    %v167 = vpop.f32.mrb[0].mxu0
    %v168 = vpop.f32.mrb[0].mxu0
    %v169 = vadd.f32 %v66, %v168
    %v170 = vpop.f32.mrb[0].mxu0
    %171 = vmatprep.mubr.bf16.mxu0 0
    %172 = vmatmul.mubr.bf16.gmra.mrb[0].mxu0 %v91
    %v173 = vpop.f32.mrb[0].mxu0
    %v174 = vadd.f32 %v66, %v173
    %v175 = vpop.f32.mrb[0].mxu0
    %v176 = vpop.f32.mrb[0].mxu0
    %v177 = vadd.f32 %v66, %v176
    %v178 = vpop.f32.mrb[0].mxu0
    %179 = vmatprep.mubr.bf16.mxu0 0
    %180 = vmatmul.mubr.bf16.gmra.mrb[0].mxu0 %v94
    %v181 = vpop.f32.mrb[0].mxu0
    %v182 = vadd.f32 %v66, %v181
    %v183 = vpop.f32.mrb[0].mxu0
    %v184 = vpop.f32.mrb[0].mxu0
    %v185 = vadd.f32 %v66, %v184
    %v186 = vpop.f32.mrb[0].mxu0
    %187 = vmatprep.mubr.bf16.mxu0 0
    %188 = vmatmul.mubr.bf16.gmra.mrb[0].mxu0 %v97
    %v189 = vpop.f32.mrb[0].mxu0
    %v190 = vadd.f32 %v66, %v189
    %v191 = vpop.f32.mrb[0].mxu0
    %v192 = vpop.f32.mrb[0].mxu0
    %v193 = vadd.f32 %v66, %v192
    %v194 = vpop.f32.mrb[0].mxu0
    %195 = vdwg.mxu0
    %v196 = vmax.f32 %v134, 0.0
    %v197 = vmax.f32 %v137, 0.0
    %v198 = vmax.f32 %v142, 0.0
    %v199 = vmax.f32 %v145, 0.0
    %v200 = vmax.f32 %v150, 0.0
    %v201 = vmax.f32 %v153, 0.0
    %v202 = vmax.f32 %v158, 0.0
    %v203 = vmax.f32 %v161, 0.0
    %v204 = vmax.f32 %v166, 0.0
    %v205 = vmax.f32 %v169, 0.0
    %v206 = vmax.f32 %v174, 0.0
    %v207 = vmax.f32 %v177, 0.0
    %v208 = vmax.f32 %v182, 0.0
    %v209 = vmax.f32 %v185, 0.0
    %v210 = vmax.f32 %v190, 0.0
    %v211 = vmax.f32 %v193, 0.0
    %v212 = vpack.c.bf16 %v197, %v196
    %v213 = vpack.c.bf16 %v199, %v198
    %v214 = vpack.c.bf16 %v201, %v200
    %v215 = vpack.c.bf16 %v203, %v202
    %v216 = vpack.c.bf16 %v205, %v204
    %v217 = vpack.c.bf16 %v207, %v206
    %v218 = vpack.c.bf16 %v209, %v208
    %v219 = vpack.c.bf16 %v211, %v210
    %v220 = vld [vmem:[%s3] sm:$0xf]
    %v221 = vld [vmem:[%s3 + $0x4] sm:$0xf]
    %v222 = vld [vmem:[%s3 + $0x8] sm:$0xf]
    %v223 = vld [vmem:[%s3 + $0xc] sm:$0xf]
    %v224 = vld [vmem:[%s3 + $0x10] sm:$0xf]
    %v225 = vld [vmem:[%s3 + $0x14] sm:$0xf]
    %v226 = vld [vmem:[%s3 + $0x18] sm:$0xf]
    %v227 = vld [vmem:[%s3 + $0x1c] sm:$0xf]
    %v228 = vld [vmem:[%s3 + $0x20] sm:$0xf]
    %v229 = vld [vmem:[%s3 + $0x24] sm:$0xf]
    %v230 = vld [vmem:[%s3 + $0x28] sm:$0xf]
    %v231 = vld [vmem:[%s3 + $0x2c] sm:$0xf]
    %v232 = vld [vmem:[%s3 + $0x30] sm:$0xf]
    %v233 = vld [vmem:[%s3 + $0x34] sm:$0xf]
    %v234 = vld [vmem:[%s3 + $0x38] sm:$0xf]
    %v235 = vld [vmem:[%s3 + $0x3c] sm:$0xf]
    %v236 = vld [vmem:[%s4] sm:$0x1]
    %v238 = vlaneseq
    %v239 = vshrl.u32 %v238, 7
    %v240 = vsub.s32 0, %v239
    %v241 = vrot.slane %v236, %v240
    %v259 = vunpack.c.l.b16 %v220
    %v260 = vunpack.c.l.b16 %v221
    %v261 = vunpack.c.l.b16 %v222
    %v262 = vunpack.c.l.b16 %v223
    %v263 = vunpack.c.l.b16 %v224
    %v264 = vunpack.c.l.b16 %v225
    %v265 = vunpack.c.l.b16 %v226
    %v266 = vunpack.c.l.b16 %v227
    %v267 = vunpack.c.l.b16 %v228
    %v268 = vunpack.c.l.b16 %v229
    %v269 = vunpack.c.l.b16 %v230
    %v270 = vunpack.c.l.b16 %v231
    %v271 = vunpack.c.l.b16 %v232
    %v272 = vunpack.c.l.b16 %v233
    %v273 = vunpack.c.l.b16 %v234
    %v274 = vunpack.c.l.b16 %v235
    %v275 = vpack.c.b16 %v260, %v259
    %v276 = vpack.c.b16 %v262, %v261
    %v277 = vpack.c.b16 %v264, %v263
    %v278 = vpack.c.b16 %v266, %v265
    %v279 = vpack.c.b16 %v268, %v267
    %v280 = vpack.c.b16 %v270, %v269
    %v281 = vpack.c.b16 %v272, %v271
    %v282 = vpack.c.b16 %v274, %v273
    %291 = vmatprep.subr.bf16.mxu0 0
    %292 = vmatpush1.bf16.msra.mxu0 %v275
    %293 = vmatprep.subr.bf16.mxu0 0
    %294 = vmatpush1.bf16.msra.mxu0 %v276
    %295 = vmatprep.subr.bf16.mxu0 0
    %296 = vmatpush1.bf16.msra.mxu0 %v277
    %297 = vmatprep.subr.bf16.mxu0 0
    %298 = vmatpush1.bf16.msra.mxu0 %v278
    %299 = vmatprep.subr.bf16.mxu0 0
    %300 = vmatpush1.bf16.msra.mxu0 %v279
    %301 = vmatprep.subr.bf16.mxu0 0
    %302 = vmatpush1.bf16.msra.mxu0 %v280
    %303 = vmatprep.subr.bf16.mxu0 0
    %304 = vmatpush1.bf16.msra.mxu0 %v281
    %305 = vmatprep.subr.bf16.mxu0 0
    %306 = vmatpush1.bf16.msra.mxu0 %v282
    %307 = vmatprep.subr.bf16.mxu0 0
    %308 = vmatpush1.bf16.msra.mxu0 0
    %309 = vmatprep.subr.bf16.mxu0 0
    %310 = vmatpush1.bf16.msra.mxu0 0
    %311 = vmatprep.subr.bf16.mxu0 0
    %312 = vmatpush1.bf16.msra.mxu0 0
    %313 = vmatprep.subr.bf16.mxu0 0
    %314 = vmatpush1.bf16.msra.mxu0 0
    %315 = vmatprep.subr.bf16.mxu0 0
    %316 = vmatpush1.bf16.msra.mxu0 0
    %317 = vmatprep.subr.bf16.mxu0 0
    %318 = vmatpush1.bf16.msra.mxu0 0
    %319 = vmatprep.subr.bf16.mxu0 0
    %320 = vmatpush1.bf16.msra.mxu0 0
    %321 = vmatprep.subr.bf16.mxu0 0
    %322 = vmatpush1.bf16.msra.mxu0 0
    %323 = vmatprep.mubr.bf16.mxu0 0
    %324 = vmatmul.mubr.bf16.gmra.mrb[0].mxu0 %v212
    %v325 = vpop.f32.mrb[0].mxu0
    %v326 = vadd.f32 %v241, %v325
    %v327 = vpop.f32.mrb[0].mxu0
    %v328 = vpop.f32.mrb[0].mxu0
    %v329 = vadd.f32 %v241, %v328
    %v330 = vpop.f32.mrb[0].mxu0
    %331 = vmatprep.mubr.bf16.mxu0 0
    %332 = vmatmul.mubr.bf16.gmra.mrb[0].mxu0 %v213
    %v333 = vpop.f32.mrb[0].mxu0
    %v334 = vadd.f32 %v241, %v333
    %v335 = vpop.f32.mrb[0].mxu0
    %v336 = vpop.f32.mrb[0].mxu0
    %v337 = vadd.f32 %v241, %v336
    %v338 = vpop.f32.mrb[0].mxu0
    %339 = vmatprep.mubr.bf16.mxu0 0
    %340 = vmatmul.mubr.bf16.gmra.mrb[0].mxu0 %v214
    %v341 = vpop.f32.mrb[0].mxu0
    %v342 = vadd.f32 %v241, %v341
    %v343 = vpop.f32.mrb[0].mxu0
    %v344 = vpop.f32.mrb[0].mxu0
    %v345 = vadd.f32 %v241, %v344
    %v346 = vpop.f32.mrb[0].mxu0
    %347 = vmatprep.mubr.bf16.mxu0 0
    %348 = vmatmul.mubr.bf16.gmra.mrb[0].mxu0 %v215
    %v349 = vpop.f32.mrb[0].mxu0
    %v350 = vadd.f32 %v241, %v349
    %v351 = vpop.f32.mrb[0].mxu0
    %v352 = vpop.f32.mrb[0].mxu0
    %v353 = vadd.f32 %v241, %v352
    %v354 = vpop.f32.mrb[0].mxu0
    %355 = vmatprep.mubr.bf16.mxu0 0
    %356 = vmatmul.mubr.bf16.gmra.mrb[0].mxu0 %v216
    %v357 = vpop.f32.mrb[0].mxu0
    %v358 = vadd.f32 %v241, %v357
    %v359 = vpop.f32.mrb[0].mxu0
    %v360 = vpop.f32.mrb[0].mxu0
    %v361 = vadd.f32 %v241, %v360
    %v362 = vpop.f32.mrb[0].mxu0
    %363 = vmatprep.mubr.bf16.mxu0 0
    %364 = vmatmul.mubr.bf16.gmra.mrb[0].mxu0 %v217
    %v365 = vpop.f32.mrb[0].mxu0
    %v366 = vadd.f32 %v241, %v365
    %v367 = vpop.f32.mrb[0].mxu0
    %v368 = vpop.f32.mrb[0].mxu0
    %v369 = vadd.f32 %v241, %v368
    %v370 = vpop.f32.mrb[0].mxu0
    %371 = vmatprep.mubr.bf16.mxu0 0
    %372 = vmatmul.mubr.bf16.gmra.mrb[0].mxu0 %v218
    %v373 = vpop.f32.mrb[0].mxu0
    %v374 = vadd.f32 %v241, %v373
    %v375 = vpop.f32.mrb[0].mxu0
    %v376 = vpop.f32.mrb[0].mxu0
    %v377 = vadd.f32 %v241, %v376
    %v378 = vpop.f32.mrb[0].mxu0
    %379 = vmatprep.mubr.bf16.mxu0 0
    %380 = vmatmul.mubr.bf16.gmra.mrb[0].mxu0 %v219
    %v381 = vpop.f32.mrb[0].mxu0
    %v382 = vadd.f32 %v241, %v381
    %v383 = vpop.f32.mrb[0].mxu0
    %v384 = vpop.f32.mrb[0].mxu0
    %v385 = vadd.f32 %v241, %v384
    %v386 = vpop.f32.mrb[0].mxu0
    %387 = vdwg.mxu0
    %v388 = vmax.f32 %v326, 0.0
    %v389 = vmax.f32 %v329, 0.0
    %v390 = vmax.f32 %v334, 0.0
    %v391 = vmax.f32 %v337, 0.0
    %v392 = vmax.f32 %v342, 0.0
    %v393 = vmax.f32 %v345, 0.0
    %v394 = vmax.f32 %v350, 0.0
    %v395 = vmax.f32 %v353, 0.0
    %v396 = vmax.f32 %v358, 0.0
    %v397 = vmax.f32 %v361, 0.0
    %v398 = vmax.f32 %v366, 0.0
    %v399 = vmax.f32 %v369, 0.0
    %v400 = vmax.f32 %v374, 0.0
    %v401 = vmax.f32 %v377, 0.0
    %v402 = vmax.f32 %v382, 0.0
    %v403 = vmax.f32 %v385, 0.0
    %v404 = vpack.c.bf16 %v389, %v388
    %v405 = vpack.c.bf16 %v391, %v390
    %v406 = vpack.c.bf16 %v393, %v392
    %v407 = vpack.c.bf16 %v395, %v394
    %v408 = vpack.c.bf16 %v397, %v396
    %v409 = vpack.c.bf16 %v399, %v398
    %v410 = vpack.c.bf16 %v401, %v400
    %v411 = vpack.c.bf16 %v403, %v402
    %v412 = vld [vmem:[%s5] sm:$0xf]
    %v413 = vld [vmem:[%s5 + $0x4] sm:$0xf]
    %v414 = vld [vmem:[%s5 + $0x8] sm:$0xf]
    %v415 = vld [vmem:[%s5 + $0xc] sm:$0xf]
    %v416 = vld [vmem:[%s5 + $0x10] sm:$0xf]
    %v417 = vld [vmem:[%s5 + $0x14] sm:$0xf]
    %v418 = vld [vmem:[%s5 + $0x18] sm:$0xf]
    %v419 = vld [vmem:[%s5 + $0x1c] sm:$0xf]
    %v420 = vld [vmem:[%s5 + $0x20] sm:$0xf]
    %v421 = vld [vmem:[%s5 + $0x24] sm:$0xf]
    %v422 = vld [vmem:[%s5 + $0x28] sm:$0xf]
    %v423 = vld [vmem:[%s5 + $0x2c] sm:$0xf]
    %v424 = vld [vmem:[%s5 + $0x30] sm:$0xf]
    %v425 = vld [vmem:[%s5 + $0x34] sm:$0xf]
    %v426 = vld [vmem:[%s5 + $0x38] sm:$0xf]
    %v427 = vld [vmem:[%s5 + $0x3c] sm:$0xf]
    %v428 = vld [vmem:[%s6] sm:$0x1]
    %v430 = vlaneseq
    %v431 = vshrl.u32 %v430, 7
    %v432 = vsub.s32 0, %v431
    %v433 = vrot.slane %v428, %v432
    %v451 = vunpack.c.l.b16 %v412
    %v452 = vunpack.c.l.b16 %v413
    %v453 = vunpack.c.l.b16 %v414
    %v454 = vunpack.c.l.b16 %v415
    %v455 = vunpack.c.l.b16 %v416
    %v456 = vunpack.c.l.b16 %v417
    %v457 = vunpack.c.l.b16 %v418
    %v458 = vunpack.c.l.b16 %v419
    %v459 = vunpack.c.l.b16 %v420
    %v460 = vunpack.c.l.b16 %v421
    %v461 = vunpack.c.l.b16 %v422
    %v462 = vunpack.c.l.b16 %v423
    %v463 = vunpack.c.l.b16 %v424
    %v464 = vunpack.c.l.b16 %v425
    %v465 = vunpack.c.l.b16 %v426
    %v466 = vunpack.c.l.b16 %v427
    %v467 = vpack.c.b16 %v452, %v451
    %v468 = vpack.c.b16 %v454, %v453
    %v469 = vpack.c.b16 %v456, %v455
    %v470 = vpack.c.b16 %v458, %v457
    %v471 = vpack.c.b16 %v460, %v459
    %v472 = vpack.c.b16 %v462, %v461
    %v473 = vpack.c.b16 %v464, %v463
    %v474 = vpack.c.b16 %v466, %v465
    %483 = vmatprep.subr.bf16.mxu0 0
    %484 = vmatpush1.bf16.msra.mxu0 %v467
    %485 = vmatprep.subr.bf16.mxu0 0
    %486 = vmatpush1.bf16.msra.mxu0 %v468
    %487 = vmatprep.subr.bf16.mxu0 0
    %488 = vmatpush1.bf16.msra.mxu0 %v469
    %489 = vmatprep.subr.bf16.mxu0 0
    %490 = vmatpush1.bf16.msra.mxu0 %v470
    %491 = vmatprep.subr.bf16.mxu0 0
    %492 = vmatpush1.bf16.msra.mxu0 %v471
    %493 = vmatprep.subr.bf16.mxu0 0
    %494 = vmatpush1.bf16.msra.mxu0 %v472
    %495 = vmatprep.subr.bf16.mxu0 0
    %496 = vmatpush1.bf16.msra.mxu0 %v473
    %497 = vmatprep.subr.bf16.mxu0 0
    %498 = vmatpush1.bf16.msra.mxu0 %v474
    %499 = vmatprep.subr.bf16.mxu0 0
    %500 = vmatpush1.bf16.msra.mxu0 0
    %501 = vmatprep.subr.bf16.mxu0 0
    %502 = vmatpush1.bf16.msra.mxu0 0
    %503 = vmatprep.subr.bf16.mxu0 0
    %504 = vmatpush1.bf16.msra.mxu0 0
    %505 = vmatprep.subr.bf16.mxu0 0
    %506 = vmatpush1.bf16.msra.mxu0 0
    %507 = vmatprep.subr.bf16.mxu0 0
    %508 = vmatpush1.bf16.msra.mxu0 0
    %509 = vmatprep.subr.bf16.mxu0 0
    %510 = vmatpush1.bf16.msra.mxu0 0
    %511 = vmatprep.subr.bf16.mxu0 0
    %512 = vmatpush1.bf16.msra.mxu0 0
    %513 = vmatprep.subr.bf16.mxu0 0
    %514 = vmatpush1.bf16.msra.mxu0 0
    %515 = vmatprep.mubr.bf16.mxu0 0
    %516 = vmatmul.mubr.bf16.gmra.mrb[0].mxu0 %v404
    %v517 = vpop.f32.mrb[0].mxu0
    %v518 = vadd.f32 %v433, %v517
    %v519 = vpop.f32.mrb[0].mxu0
    %v520 = vpop.f32.mrb[0].mxu0
    %v521 = vadd.f32 %v433, %v520
    %v522 = vpop.f32.mrb[0].mxu0
    %523 = vmatprep.mubr.bf16.mxu0 0
    %524 = vmatmul.mubr.bf16.gmra.mrb[0].mxu0 %v405
    %v525 = vpop.f32.mrb[0].mxu0
    %v526 = vadd.f32 %v433, %v525
    %v527 = vpop.f32.mrb[0].mxu0
    %v528 = vpop.f32.mrb[0].mxu0
    %v529 = vadd.f32 %v433, %v528
    %v530 = vpop.f32.mrb[0].mxu0
    %531 = vmatprep.mubr.bf16.mxu0 0
    %532 = vmatmul.mubr.bf16.gmra.mrb[0].mxu0 %v406
    %v533 = vpop.f32.mrb[0].mxu0
    %v534 = vadd.f32 %v433, %v533
    %v535 = vpop.f32.mrb[0].mxu0
    %v536 = vpop.f32.mrb[0].mxu0
    %v537 = vadd.f32 %v433, %v536
    %v538 = vpop.f32.mrb[0].mxu0
    %539 = vmatprep.mubr.bf16.mxu0 0
    %540 = vmatmul.mubr.bf16.gmra.mrb[0].mxu0 %v407
    %v541 = vpop.f32.mrb[0].mxu0
    %v542 = vadd.f32 %v433, %v541
    %v543 = vpop.f32.mrb[0].mxu0
    %v544 = vpop.f32.mrb[0].mxu0
    %v545 = vadd.f32 %v433, %v544
    %v546 = vpop.f32.mrb[0].mxu0
    %547 = vmatprep.mubr.bf16.mxu0 0
    %548 = vmatmul.mubr.bf16.gmra.mrb[0].mxu0 %v408
    %v549 = vpop.f32.mrb[0].mxu0
    %v550 = vadd.f32 %v433, %v549
    %v551 = vpop.f32.mrb[0].mxu0
    %v552 = vpop.f32.mrb[0].mxu0
    %v553 = vadd.f32 %v433, %v552
    %v554 = vpop.f32.mrb[0].mxu0
    %555 = vmatprep.mubr.bf16.mxu0 0
    %556 = vmatmul.mubr.bf16.gmra.mrb[0].mxu0 %v409
    %v557 = vpop.f32.mrb[0].mxu0
    %v558 = vadd.f32 %v433, %v557
    %v559 = vpop.f32.mrb[0].mxu0
    %v560 = vpop.f32.mrb[0].mxu0
    %v561 = vadd.f32 %v433, %v560
    %v562 = vpop.f32.mrb[0].mxu0
    %563 = vmatprep.mubr.bf16.mxu0 0
    %564 = vmatmul.mubr.bf16.gmra.mrb[0].mxu0 %v410
    %v565 = vpop.f32.mrb[0].mxu0
    %v566 = vadd.f32 %v433, %v565
    %v567 = vpop.f32.mrb[0].mxu0
    %v568 = vpop.f32.mrb[0].mxu0
    %v569 = vadd.f32 %v433, %v568
    %v570 = vpop.f32.mrb[0].mxu0
    %571 = vmatprep.mubr.bf16.mxu0 0
    %572 = vmatmul.mubr.bf16.gmra.mrb[0].mxu0 %v411
    %v573 = vpop.f32.mrb[0].mxu0
    %v574 = vadd.f32 %v433, %v573
    %v575 = vpop.f32.mrb[0].mxu0
    %v576 = vpop.f32.mrb[0].mxu0
    %v577 = vadd.f32 %v433, %v576
    %v578 = vpop.f32.mrb[0].mxu0
    %579 = vdwg.mxu0
    %v580 = vmax.f32 %v518, 0.0
    %v581 = vmax.f32 %v521, 0.0
    %v582 = vmax.f32 %v526, 0.0
    %v583 = vmax.f32 %v529, 0.0
    %v584 = vmax.f32 %v534, 0.0
    %v585 = vmax.f32 %v537, 0.0
    %v586 = vmax.f32 %v542, 0.0
    %v587 = vmax.f32 %v545, 0.0
    %v588 = vmax.f32 %v550, 0.0
    %v589 = vmax.f32 %v553, 0.0
    %v590 = vmax.f32 %v558, 0.0
    %v591 = vmax.f32 %v561, 0.0
    %v592 = vmax.f32 %v566, 0.0
    %v593 = vmax.f32 %v569, 0.0
    %v594 = vmax.f32 %v574, 0.0
    %v595 = vmax.f32 %v577, 0.0
    %v596 = vpack.c.bf16 %v581, %v580
    %v597 = vpack.c.bf16 %v583, %v582
    %v598 = vpack.c.bf16 %v585, %v584
    %v599 = vpack.c.bf16 %v587, %v586
    %v600 = vpack.c.bf16 %v589, %v588
    %v601 = vpack.c.bf16 %v591, %v590
    %v602 = vpack.c.bf16 %v593, %v592
    %v603 = vpack.c.bf16 %v595, %v594
    %v604 = vunpack.c.l.bf16 %v596
    %v605 = vunpack.c.h.bf16 %v596
    %v606 = vunpack.c.l.bf16 %v597
    %v607 = vunpack.c.h.bf16 %v597
    %v608 = vunpack.c.l.bf16 %v598
    %v609 = vunpack.c.h.bf16 %v598
    %v610 = vunpack.c.l.bf16 %v599
    %v611 = vunpack.c.h.bf16 %v599
    %v612 = vunpack.c.l.bf16 %v600
    %v613 = vunpack.c.h.bf16 %v600
    %v614 = vunpack.c.l.bf16 %v601
    %v615 = vunpack.c.h.bf16 %v601
    %v616 = vunpack.c.l.bf16 %v602
    %v617 = vunpack.c.h.bf16 %v602
    %v618 = vunpack.c.l.bf16 %v603
    %v619 = vunpack.c.h.bf16 %v603
    %v620 = vld [vmem:[%s7] sm:$0x1]
    %v622 = vlaneseq
    %v623 = vshrl.u32 %v622, 7
    %v624 = vsub.s32 0, %v623
    %v625 = vrot.slane %v620, %v624
    %v627 = vmul.f32 %v604, %v625
    %v628 = vmul.f32 %v605, %v625
    %v629 = vmul.f32 %v606, %v625
    %v630 = vmul.f32 %v607, %v625
    %v631 = vmul.f32 %v608, %v625
    %v632 = vmul.f32 %v609, %v625
    %v633 = vmul.f32 %v610, %v625
    %v634 = vmul.f32 %v611, %v625
    %v635 = vmul.f32 %v612, %v625
    %v636 = vmul.f32 %v613, %v625
    %v637 = vmul.f32 %v614, %v625
    %v638 = vmul.f32 %v615, %v625
    %v639 = vmul.f32 %v616, %v625
    %v640 = vmul.f32 %v617, %v625
    %v641 = vmul.f32 %v618, %v625
    %v642 = vmul.f32 %v619, %v625
    %643 = vadd.xlane.f32.xlu0 %v627
    %v644 = vpop.xlane.xlu0 %643
    %645 = vadd.xlane.f32.xlu0 %v628
    %v646 = vpop.xlane.xlu0 %645
    %647 = vadd.xlane.f32.xlu0 %v629
    %v648 = vpop.xlane.xlu0 %647
    %649 = vadd.xlane.f32.xlu0 %v630
    %v650 = vpop.xlane.xlu0 %649
    %651 = vadd.xlane.f32.xlu0 %v631
    %v652 = vpop.xlane.xlu0 %651
    %653 = vadd.xlane.f32.xlu0 %v632
    %v654 = vpop.xlane.xlu0 %653
    %655 = vadd.xlane.f32.xlu0 %v633
    %v656 = vpop.xlane.xlu0 %655
    %657 = vadd.xlane.f32.xlu0 %v634
    %v658 = vpop.xlane.xlu0 %657
    %659 = vadd.xlane.f32.xlu0 %v635
    %v660 = vpop.xlane.xlu0 %659
    %661 = vadd.xlane.f32.xlu0 %v636
    %v662 = vpop.xlane.xlu0 %661
    %663 = vadd.xlane.f32.xlu0 %v637
    %v664 = vpop.xlane.xlu0 %663
    %665 = vadd.xlane.f32.xlu0 %v638
    %v666 = vpop.xlane.xlu0 %665
    %667 = vadd.xlane.f32.xlu0 %v639
    %v668 = vpop.xlane.xlu0 %667
    %669 = vadd.xlane.f32.xlu0 %v640
    %v670 = vpop.xlane.xlu0 %669
    %671 = vadd.xlane.f32.xlu0 %v641
    %v672 = vpop.xlane.xlu0 %671
    %673 = vadd.xlane.f32.xlu0 %v642
    %v674 = vpop.xlane.xlu0 %673
    %s675 = sld [smem:[#allocation2]]
    %v676 = vstv %s675
    %v677 = vadd.f32 %v644, %v676
    %v678 = vadd.f32 %v646, %v676
    %v679 = vadd.f32 %v648, %v676
    %v680 = vadd.f32 %v650, %v676
    %v681 = vadd.f32 %v652, %v676
    %v682 = vadd.f32 %v654, %v676
    %v683 = vadd.f32 %v656, %v676
    %v684 = vadd.f32 %v658, %v676
    %v685 = vadd.f32 %v660, %v676
    %v686 = vadd.f32 %v662, %v676
    %v687 = vadd.f32 %v664, %v676
    %v688 = vadd.f32 %v666, %v676
    %v689 = vadd.f32 %v668, %v676
    %v690 = vadd.f32 %v670, %v676
    %v691 = vadd.f32 %v672, %v676
    %v692 = vadd.f32 %v674, %v676
    %v709 = vlaneseq
    %v710 = vand.u32 %v709, 127
    %v711 = vlaneseq
    %v712 = vshrl.u32 %v711, 7
    %v713 = vsub.s32 %v710, %v712
    %v714 = vrot.slane %v677, %v713
    %v715 = vadd.s32 %v710, 4294967288
    %v716 = vlaneseq
    %v717 = vshrl.u32 %v716, 7
    %v718 = vsub.s32 %v715, %v717
    %v719 = vrot.slane %v678, %v718
    %vm720 = vcmask 130112
    %v721 = vsel %vm720, %v719, %v714
    %v722 = vadd.s32 %v710, 4294967280
    %v723 = vlaneseq
    %v724 = vshrl.u32 %v723, 7
    %v725 = vsub.s32 %v722, %v724
    %v726 = vrot.slane %v679, %v725
    %vm727 = vcmask 195712
    %v728 = vsel %vm727, %v726, %v721
    %v729 = vadd.s32 %v710, 4294967272
    %v730 = vlaneseq
    %v731 = vshrl.u32 %v730, 7
    %v732 = vsub.s32 %v729, %v731
    %v733 = vrot.slane %v680, %v732
    %vm734 = vcmask 261312
    %v735 = vsel %vm734, %v733, %v728
    %v736 = vadd.s32 %v710, 4294967264
    %v737 = vlaneseq
    %v738 = vshrl.u32 %v737, 7
    %v739 = vsub.s32 %v736, %v738
    %v740 = vrot.slane %v681, %v739
    %vm741 = vcmask 326912
    %v742 = vsel %vm741, %v740, %v735
    %v743 = vadd.s32 %v710, 4294967256
    %v744 = vlaneseq
    %v745 = vshrl.u32 %v744, 7
    %v746 = vsub.s32 %v743, %v745
    %v747 = vrot.slane %v682, %v746
    %vm748 = vcmask 392512
    %v749 = vsel %vm748, %v747, %v742
    %v750 = vadd.s32 %v710, 4294967248
    %v751 = vlaneseq
    %v752 = vshrl.u32 %v751, 7
    %v753 = vsub.s32 %v750, %v752
    %v754 = vrot.slane %v683, %v753
    %vm755 = vcmask 458112
    %v756 = vsel %vm755, %v754, %v749
    %v757 = vadd.s32 %v710, 4294967240
    %v758 = vlaneseq
    %v759 = vshrl.u32 %v758, 7
    %v760 = vsub.s32 %v757, %v759
    %v761 = vrot.slane %v684, %v760
    %vm762 = vcmask 523712
    %v763 = vsel %vm762, %v761, %v756
    %v764 = vadd.s32 %v710, 4294967232
    %v765 = vlaneseq
    %v766 = vshrl.u32 %v765, 7
    %v767 = vsub.s32 %v764, %v766
    %v768 = vrot.slane %v685, %v767
    %vm769 = vcmask 589312
    %v770 = vsel %vm769, %v768, %v763
    %v771 = vadd.s32 %v710, 4294967224
    %v772 = vlaneseq
    %v773 = vshrl.u32 %v772, 7
    %v774 = vsub.s32 %v771, %v773
    %v775 = vrot.slane %v686, %v774
    %vm776 = vcmask 654912
    %v777 = vsel %vm776, %v775, %v770
    %v778 = vadd.s32 %v710, 4294967216
    %v779 = vlaneseq
    %v780 = vshrl.u32 %v779, 7
    %v781 = vsub.s32 %v778, %v780
    %v782 = vrot.slane %v687, %v781
    %vm783 = vcmask 720512
    %v784 = vsel %vm783, %v782, %v777
    %v785 = vadd.s32 %v710, 4294967208
    %v786 = vlaneseq
    %v787 = vshrl.u32 %v786, 7
    %v788 = vsub.s32 %v785, %v787
    %v789 = vrot.slane %v688, %v788
    %vm790 = vcmask 786112
    %v791 = vsel %vm790, %v789, %v784
    %v792 = vadd.s32 %v710, 4294967200
    %v793 = vlaneseq
    %v794 = vshrl.u32 %v793, 7
    %v795 = vsub.s32 %v792, %v794
    %v796 = vrot.slane %v689, %v795
    %vm797 = vcmask 851712
    %v798 = vsel %vm797, %v796, %v791
    %v799 = vadd.s32 %v710, 4294967192
    %v800 = vlaneseq
    %v801 = vshrl.u32 %v800, 7
    %v802 = vsub.s32 %v799, %v801
    %v803 = vrot.slane %v690, %v802
    %vm804 = vcmask 917312
    %v805 = vsel %vm804, %v803, %v798
    %v806 = vadd.s32 %v710, 4294967184
    %v807 = vlaneseq
    %v808 = vshrl.u32 %v807, 7
    %v809 = vsub.s32 %v806, %v808
    %v810 = vrot.slane %v691, %v809
    %vm811 = vcmask 982912
    %v812 = vsel %vm811, %v810, %v805
    %v813 = vadd.s32 %v710, 4294967176
    %v814 = vlaneseq
    %v815 = vshrl.u32 %v814, 7
    %v816 = vsub.s32 %v813, %v815
    %v817 = vrot.slane %v692, %v816
    %vm818 = vcmask 1048512
    %v819 = vsel %vm818, %v817, %v812
    %821 = vst [vmem:[#allocation3] sm:$0x1] %v819
    // Predicated region
    $region38: #{tpu_custom_call.1} parent=1 // pred_check
      _
    $region39: #{tpu_custom_call.1} parent=1 // pred_check_branch
      %823 = sbr.rel (0) target = $region41
    $region40: #{tpu_custom_call.1} parent=1 // pred_region
      %s825 = ssub.s32 16, 16
      %826 = vsyncadd [#allocation4], %s825
      %s828 = sshll.u32 [#allocation3], 4
      %s829 = int_to_ptr.vmem [resolvable:$true] %s828
      %831 = dma.vmem_to_hbm [thread:$0]  %s829, 16, %s9, [#allocation4]
    $region41: #{tpu_custom_call.1} parent=1 // pred_fallthru
      _
    // Predicated region
    $region42: #{tpu_custom_call.1} parent=1 // pred_check
      _
    $region43: #{tpu_custom_call.1} parent=1 // pred_check_branch
      %833 = sbr.rel (0) target = $region45
    $region44: #{tpu_custom_call.1} parent=1 // pred_region
      %834 = dma.done [#allocation4], 16
    $region45: #{tpu_custom_call.1} parent=1 // pred_fallthru
      _
    %835 = vsyncpa [#allocation4], 1

</llo_original>
